<compile_context>
chip_gen: v7x
topology: tpu7x:2x2x1
jax: 0.10.0
libtpu: 0.0.40
codegen_flags: <defaults>
</compile_context>

<pallas_src>
import functools

import jax
import jax.numpy as jnp
from jax.experimental import pallas as pl
from jax.experimental.pallas import tpu as pltpu

BN_EPS = 1e-5


def _round_up(x, m):
    return (x + m - 1) // m * m


def _nbytes(shape, dtype):
    n = 1
    for d in shape:
        n *= int(d)
    return n * jnp.dtype(dtype).itemsize


def _choose_tile_n(n, target=8192, min_tiles=8):
    """Pick (tile_n, n_padded): points-per-tile on the lane axis.

    Small / awkward N: one full-width tile (block dim == array dim, always legal,
    no wrapper pad).  Large N: a multiple of 128 close to `target`, capped so the
    grid keeps >= min_tiles steps along N (megacore sharding + pipeline depth).
    """
    if n <= target:
        return n, n
    n_pad = _round_up(n, 128)
    cap = max(128, min(target, (n_pad // min_tiles) // 128 * 128))
    tile = 128
    for cand in range(cap, 127, -128):
        if n_pad % cand == 0:
            tile = cand
            break
    return tile, n_pad


# ---------------------------------------------------------------------------
# Kernel: one Conv1d(kernel=1) layer over a (Cin, tile_n) channel-major tile.
#   refs: x_parts..., [bn_scale, bn_shift], w, b, y_out, [stats_out]
# ---------------------------------------------------------------------------
def _layer_kernel(num_inputs, has_bn, has_stats, final_tanh, mask_n, tile_n,
                  *refs):
    it = iter(refs)
    x_refs = [next(it) for _ in range(num_inputs)]
    a_ref = next(it) if has_bn else None
    c_ref = next(it) if has_bn else None
    w_ref = next(it)                    # (Cout, Cin) bf16, VMEM-resident
    b_ref = next(it)                    # (Cout, 1)  f32
    y_ref = next(it)                    # (Cout, tile_n)
    st_ref = next(it) if has_stats else None

    if num_inputs == 1:
        h = x_refs[0][...]
    else:
        # Layer 1: in-kernel channel concat of x and context (no wrapper pass).
        h = jnp.concatenate([r[...].astype(jnp.bfloat16) for r in x_refs],
                            axis=0)

    if has_bn:
        # Previous layer's BN + ReLU folded into one per-channel scale/shift.
        h = jnp.maximum(h.astype(jnp.float32) * a_ref[...] + c_ref[...],
                        0.0).astype(jnp.bfloat16)
    else:
        h = h.astype(jnp.bfloat16)

    # Conv1d(kernel_size=1), channel-major: bf16 MXU matmul, f32 acc + f32 bias.
    y = jnp.dot(w_ref[...], h, preferred_element_type=jnp.float32) + b_ref[...]

    if final_tanh:
        # Lane-dense (out_dim, tile_n) store; output already in NCW layout.
        y_ref[...] = jnp.tanh(y).astype(y_ref.dtype)
    else:
        y_ref[...] = y.astype(y_ref.dtype)

    if has_stats:
        # Single-pass per-tile, per-channel sum / sum-of-squares of the pre-BN
        # output, packed into one (Cout, 2) block; folded outside the kernel.
        if mask_n is not None:
            col = (jax.lax.broadcasted_iota(jnp.int32, (1, tile_n), 1)
                   + pl.program_id(1) * tile_n)
            y = jnp.where(col < mask_n, y, 0.0)        # exclude padded points
        s = jnp.sum(y, axis=1, keepdims=True)          # (Cout, 1)
        q = jnp.sum(y * y, axis=1, keepdims=True)      # (Cout, 1)
        st_ref[...] = jnp.concatenate([s, q], axis=1)  # (Cout, 2)


# ---------------------------------------------------------------------------
# One layer = one pallas_call, grid (B, n_tiles) over points, both "parallel".
# ---------------------------------------------------------------------------
def _layer(inputs, w, b, bn_scale=None, bn_shift=None, *, final_tanh=False,
           tile_n, n_valid):
    B, _, n_pad = inputs[0].shape
    cins = [int(a.shape[1]) for a in inputs]
    cin = sum(cins)
    cout = int(w.shape[0])
    n_tiles = n_pad // tile_n
    has_bn = bn_scale is not None
    has_stats = not final_tanh
    mask_n = n_valid if n_valid != n_pad else None      # mask only if padded

    args = list(inputs)
    in_specs = [pl.BlockSpec((None, c, tile_n), lambda bi, ji: (bi, 0, ji))
                for c in cins]
    if has_bn:
        args += [bn_scale, bn_shift]
        in_specs += [pl.BlockSpec((cin, 1), lambda bi, ji: (0, 0)),
                     pl.BlockSpec((cin, 1), lambda bi, ji: (0, 0))]
    args += [w, b]
    in_specs += [pl.BlockSpec((cout, cin), lambda bi, ji: (0, 0)),
                 pl.BlockSpec((cout, 1), lambda bi, ji: (0, 0))]

    y_dtype = jnp.float32 if final_tanh else jnp.bfloat16
    out_shape = [jax.ShapeDtypeStruct((B, cout, n_pad), y_dtype)]
    out_specs = [pl.BlockSpec((None, cout, tile_n), lambda bi, ji: (bi, 0, ji))]
    if has_stats:
        out_shape.append(
            jax.ShapeDtypeStruct((B, n_tiles, cout, 2), jnp.float32))
        out_specs.append(
            pl.BlockSpec((None, None, cout, 2), lambda bi, ji: (bi, ji, 0, 0)))

    kernel = functools.partial(_layer_kernel, len(inputs), has_bn, has_stats,
                               final_tanh, mask_n, tile_n)

    # Explicit VMEM budget: double-buffered tiles + resident params + headroom
    # (v5e's scoped default is only 16 MiB; avoid spilling once tiles are big).
    blk = sum(_nbytes((c, tile_n), a.dtype) for c, a in zip(cins, inputs))
    blk += _nbytes((cout, tile_n), y_dtype)
    blk += _nbytes(w.shape, w.dtype) + _nbytes(b.shape, b.dtype)
    if has_bn:
        blk += 2 * _nbytes(bn_scale.shape, bn_scale.dtype)
    if has_stats:
        blk += cout * 2 * 4
    resident = 2 * blk + (1 << 20)
    vmem_limit = int(min(max(2 * resident, 16 << 20), 40 << 20))

    return pl.pallas_call(
        kernel,
        out_shape=out_shape,
        grid_spec=pltpu.PrefetchScalarGridSpec(
            num_scalar_prefetch=0,
            grid=(B, n_tiles),
            in_specs=in_specs,
            out_specs=out_specs,
        ),
        compiler_params=pltpu.CompilerParams(
            dimension_semantics=("parallel", "parallel"),   # shards across TCs
            vmem_limit_bytes=vmem_limit,
        ),
    )(*args)


def _fold_bn(stats, gamma, beta, count):
    """Reduce per-tile stats and fold BN into a single scale/shift (plain JAX)."""
    s = jnp.sum(stats[..., 0], axis=(0, 1))                 # (Cout,)
    q = jnp.sum(stats[..., 1], axis=(0, 1))
    mean = s / count
    var = jnp.maximum(q / count - mean * mean, 0.0)         # biased (PyTorch fwd)
    a = gamma.reshape(-1) * jax.lax.rsqrt(var + BN_EPS)
    c = beta.reshape(-1) - mean * a
    return (a.reshape(-1, 1).astype(jnp.float32),
            c.reshape(-1, 1).astype(jnp.float32))


# ---------------------------------------------------------------------------
# Parameters.  init_params keeps f32 "math" layout (used by the reference);
# prepare_params does the one-time cast/transpose to the kernel-resident layout.
# ---------------------------------------------------------------------------
def init_params(key, bottleneck_size=64, output_dim=2):
    c1 = bottleneck_size
    c2 = bottleneck_size // 2
    c3 = bottleneck_size // 4
    ks = jax.random.split(key, 11)

    def conv_w(k, cin, cout):
        bound = 1.0 / jnp.sqrt(cin)
        return jax.random.uniform(k, (cin, cout), jnp.float32, -bound, bound)

    def conv_b(k, cin, cout):
        bound = 1.0 / jnp.sqrt(cin)
        return jax.random.uniform(k, (1, cout), jnp.float32, -bound, bound)

    return dict(
        w1=conv_w(ks[0], c1, c1), b1=conv_b(ks[1], c1, c1),
        w2=conv_w(ks[2], c1, c2), b2=conv_b(ks[3], c1, c2),
        w3=conv_w(ks[4], c2, c3), b3=conv_b(ks[5], c2, c3),
        w4=conv_w(ks[6], c3, output_dim), b4=conv_b(ks[7], c3, output_dim),
        g1=1.0 + 0.1 * jax.random.normal(ks[8], (1, c1), jnp.float32),
        be1=0.05 * jnp.ones((1, c1), jnp.float32),
        g2=1.0 + 0.1 * jax.random.normal(ks[9], (1, c2), jnp.float32),
        be2=-0.05 * jnp.ones((1, c2), jnp.float32),
        g3=1.0 + 0.1 * jax.random.normal(ks[10], (1, c3), jnp.float32),
        be3=0.02 * jnp.ones((1, c3), jnp.float32),
    )


def prepare_params(params):
    """One-time cast to kernel layout: bf16 (Cout,Cin) weights, f32 (Cout,1) rest."""
    prep = {}
    for l in (1, 2, 3, 4):
        prep[f"w{l}"] = jnp.asarray(params[f"w{l}"]).T.astype(jnp.bfloat16)
        prep[f"b{l}"] = jnp.asarray(params[f"b{l}"]).reshape(-1, 1).astype(jnp.float32)
    for l in (1, 2, 3):
        prep[f"g{l}"] = jnp.asarray(params[f"g{l}"]).reshape(-1, 1).astype(jnp.float32)
        prep[f"be{l}"] = jnp.asarray(params[f"be{l}"]).reshape(-1, 1).astype(jnp.float32)
    return prep


# ---------------------------------------------------------------------------
# Forward pass (PyTorch NCW in/out, no wrapper layout passes).
# ---------------------------------------------------------------------------
def pointgencon_forward(x, context, kp, *, tile_n_target=8192):
    """x: (B, Cx, N), context: (B, Cc, N), kp: prepare_params(...) output.

    Returns (B, out_dim, N).
    """
    B, _, N = x.shape
    tile_n, n_pad = _choose_tile_n(N, tile_n_target)
    if n_pad != N:
        pad = ((0, 0), (0, 0), (0, n_pad - N))
        x = jnp.pad(x, pad)
        context = jnp.pad(context, pad)
    count = jnp.float32(B * N)

    y1, st1 = _layer([x, context], kp["w1"], kp["b1"],
                     tile_n=tile_n, n_valid=N)
    a1, c1 = _fold_bn(st1, kp["g1"], kp["be1"], count)

    y2, st2 = _layer([y1], kp["w2"], kp["b2"], a1, c1,
                     tile_n=tile_n, n_valid=N)
    a2, c2 = _fold_bn(st2, kp["g2"], kp["be2"], count)

    y3, st3 = _layer([y2], kp["w3"], kp["b3"], a2, c2,
                     tile_n=tile_n, n_valid=N)
    a3, c3 = _fold_bn(st3, kp["g3"], kp["be3"], count)

    (y4,) = _layer([y3], kp["w4"], kp["b4"], a3, c3, final_tanh=True,
                   tile_n=tile_n, n_valid=N)

    return y4 if n_pad == N else y4[:, :, :N]


# ---------------------------------------------------------------------------
# Pure-JAX f32 reference (matches the PyTorch module in training mode).
# ---------------------------------------------------------------------------
def pointgencon_reference(x, context, params):
    xc = jnp.concatenate([x, context], axis=1).astype(jnp.float32)
    B, C1, N = xc.shape
    h = jnp.transpose(xc, (0, 2, 1)).reshape(B * N, C1)

    def layer(h, w, b, g=None, be=None, act=None):
        y = h @ w + b
        if g is not None:
            mean = jnp.mean(y, axis=0, keepdims=True)
            var = jnp.mean((y - mean) ** 2, axis=0, keepdims=True)
            y = (y - mean) * jax.lax.rsqrt(var + BN_EPS) * g + be
            y = jnp.maximum(y, 0.0)
        if act == "tanh":
            y = jnp.tanh(y)
        return y

    h = layer(h, params["w1"], params["b1"], params["g1"], params["be1"])
    h = layer(h, params["w2"], params["b2"], params["g2"], params["be2"])
    h = layer(h, params["w3"], params["b3"], params["g3"], params["be3"])
    h = layer(h, params["w4"], params["b4"], act="tanh")
    out_dim = params["w4"].shape[1]
    return jnp.transpose(h.reshape(B, N, out_dim), (0, 2, 1))


if __name__ == "__main__":
    # Small shapes consistent with the module: bottleneck_size = Cx + Cc = 64.
    Cx, Cc = 32, 32
    bottleneck_size, output_dim = Cx + Cc, 2

    key = jax.random.PRNGKey(0)
    params = init_params(jax.random.fold_in(key, 7), bottleneck_size, output_dim)
    kparams = prepare_params(params)              # one-time cast, outside jit

    # Case 1: tiny shapes, single full-width tile per batch (default target).
    # Case 2: small tile target to exercise multi-tile grid, N-padding and the
    #         masked cross-tile BN statistics path.
    fwd_default = jax.jit(pointgencon_forward)
    fwd_tiled = jax.jit(functools.partial(pointgencon_forward, tile_n_target=128))
    cases = [((2, 16), fwd_default), ((2, 600), fwd_tiled)]

    for (B, N), fwd in cases:
        kx, kc = jax.random.split(jax.random.fold_in(key, N))
        x = jax.random.normal(kx, (B, Cx, N), jnp.float32)
        context = jax.random.normal(kc, (B, Cc, N), jnp.float32)

        y = fwd(x, context, kparams)
        jax.block_until_ready(y)

        y_ref = pointgencon_reference(x, context, params)

        assert y.shape == (B, output_dim, N), y.shape
        assert bool(jnp.all(jnp.isfinite(y)))
        assert bool(jnp.all(jnp.abs(y) <= 1.0))          # tanh output range
        err = float(jnp.max(jnp.abs(y.astype(jnp.float32) - y_ref)))
        assert err < 8e-2, f"N={N}: max |err| vs f32 reference = {err}"

    print("KERNEL_OK")
</pallas_src>

<mosaic_0001>
module attributes {stable_mosaic.version = 11 : i64} {
  func.func @_layer_kernel(%arg0: i32, %arg1: i32, %arg2: memref<1x32x16xf32, #tpu.memory_space<vmem>>, %arg3: memref<1x32x16xf32, #tpu.memory_space<vmem>>, %arg4: memref<64x64xbf16, #tpu.memory_space<vmem>>, %arg5: memref<64x1xf32, #tpu.memory_space<vmem>>, %arg6: memref<1x64x16xbf16, #tpu.memory_space<vmem>>, %arg7: memref<1x1x64x2xf32, #tpu.memory_space<vmem>>) attributes {dimension_semantics = [#tpu.dimension_semantics<parallel>, #tpu.dimension_semantics<parallel>], iteration_bounds = array<i64: 2, 1>, scalar_prefetch = 0 : i64, scratch_operands = 0 : i64, tpu.core_type = #tpu.core_type<tc>, window_params = [{transform_indices = @transform_0, window_bounds = array<i64: 1, 32, 16>}, {transform_indices = @transform_1, window_bounds = array<i64: 1, 32, 16>}, {pipeline_mode = #tpu.pipeline_mode<synchronous>, transform_indices = @transform_2, window_bounds = array<i64: 64, 64>}, {pipeline_mode = #tpu.pipeline_mode<synchronous>, transform_indices = @transform_3, window_bounds = array<i64: 64, 1>}, {transform_indices = @transform_4, window_bounds = array<i64: 1, 64, 16>}, {transform_indices = @transform_5, window_bounds = array<i64: 1, 1, 64, 2>}]} {
    %c0 = arith.constant 0 : index
    %c0_0 = arith.constant 0 : index
    %c0_1 = arith.constant 0 : index
    %0 = vector.load %arg2[%c0, %c0_0, %c0_1] : memref<1x32x16xf32, #tpu.memory_space<vmem>>, vector<1x32x16xf32>
    %1 = vector.shape_cast %0 : vector<1x32x16xf32> to vector<32x16xf32>
    %2 = arith.truncf %1 : vector<32x16xf32> to vector<32x16xbf16>
    %c0_2 = arith.constant 0 : index
    %c0_3 = arith.constant 0 : index
    %c0_4 = arith.constant 0 : index
    %3 = vector.load %arg3[%c0_2, %c0_3, %c0_4] : memref<1x32x16xf32, #tpu.memory_space<vmem>>, vector<1x32x16xf32>
    %4 = vector.shape_cast %3 : vector<1x32x16xf32> to vector<32x16xf32>
    %5 = arith.truncf %4 : vector<32x16xf32> to vector<32x16xbf16>
    %6 = tpu.concatenate %2, %5 in 0 : vector<32x16xbf16>, vector<32x16xbf16> -> vector<64x16xbf16>
    %c0_5 = arith.constant 0 : index
    %c0_6 = arith.constant 0 : index
    %7 = vector.load %arg4[%c0_5, %c0_6] : memref<64x64xbf16, #tpu.memory_space<vmem>>, vector<64x64xbf16>
    %cst = arith.constant dense<0.000000e+00> : vector<64x16xf32>
    %8 = tpu.matmul %7, %6, %cst {dimension_numbers = #tpu.dot_dimension_numbers<[1], [0], [0], [1], [0, 0, 1, 1], [], []>} : vector<64x64xbf16>, vector<64x16xbf16>, vector<64x16xf32> -> vector<64x16xf32>
    %c0_7 = arith.constant 0 : index
    %c0_8 = arith.constant 0 : index
    %9 = vector.load %arg5[%c0_7, %c0_8] : memref<64x1xf32, #tpu.memory_space<vmem>>, vector<64x1xf32>
    %10 = vector.broadcast %9 : vector<64x1xf32> to vector<64x16xf32>
    %11 = arith.addf %8, %10 : vector<64x16xf32>
    %12 = arith.truncf %11 : vector<64x16xf32> to vector<64x16xbf16>
    %c0_9 = arith.constant 0 : index
    %c0_10 = arith.constant 0 : index
    %c0_11 = arith.constant 0 : index
    %13 = vector.load %arg6[%c0_9, %c0_10, %c0_11] : memref<1x64x16xbf16, #tpu.memory_space<vmem>>, vector<1x64x16xbf16>
    %14 = vector.shape_cast %13 : vector<1x64x16xbf16> to vector<64x16xbf16>
    %15 = vector.shape_cast %12 : vector<64x16xbf16> to vector<1x64x16xbf16>
    tpu.vector_store %arg6[%c0_9, %c0_10, %c0_11], %15 {strides = array<i32>} : memref<1x64x16xbf16, #tpu.memory_space<vmem>>, vector<1x64x16xbf16>,
    %cst_12 = arith.constant dense<0.000000e+00> : vector<64xf32>
    %16 = vector.multi_reduction <add>, %11, %cst_12 [1] : vector<64x16xf32> to vector<64xf32>
    %17 = vector.shape_cast %16 : vector<64xf32> to vector<64x1xf32>
    %18 = arith.mulf %11, %11 : vector<64x16xf32>
    %cst_13 = arith.constant dense<0.000000e+00> : vector<64xf32>
    %19 = vector.multi_reduction <add>, %18, %cst_13 [1] : vector<64x16xf32> to vector<64xf32>
    %20 = vector.shape_cast %19 : vector<64xf32> to vector<64x1xf32>
    %21 = tpu.concatenate %17, %20 in 1 : vector<64x1xf32>, vector<64x1xf32> -> vector<64x2xf32>
    %c0_14 = arith.constant 0 : index
    %c0_15 = arith.constant 0 : index
    %c0_16 = arith.constant 0 : index
    %c0_17 = arith.constant 0 : index
    %22 = vector.load %arg7[%c0_14, %c0_15, %c0_16, %c0_17] : memref<1x1x64x2xf32, #tpu.memory_space<vmem>>, vector<1x1x64x2xf32>
    %23 = vector.shape_cast %22 : vector<1x1x64x2xf32> to vector<64x2xf32>
    %24 = vector.shape_cast %21 : vector<64x2xf32> to vector<1x1x64x2xf32>
    tpu.vector_store %arg7[%c0_14, %c0_15, %c0_16, %c0_17], %24 {strides = array<i32>} : memref<1x1x64x2xf32, #tpu.memory_space<vmem>>, vector<1x1x64x2xf32>,
    return
  }
  func.func @transform_0(%arg0: i32, %arg1: i32) -> (i32, i32, i32) {
    %c0_i32 = arith.constant 0 : i32
    %c0_i32_0 = arith.constant 0 : i32
    return %arg0, %c0_i32, %arg1 : i32, i32, i32
  }
  func.func @transform_1(%arg0: i32, %arg1: i32) -> (i32, i32, i32) {
    %c0_i32 = arith.constant 0 : i32
    %c0_i32_0 = arith.constant 0 : i32
    return %arg0, %c0_i32, %arg1 : i32, i32, i32
  }
  func.func @transform_2(%arg0: i32, %arg1: i32) -> (i32, i32) {
    %c0_i32 = arith.constant 0 : i32
    %c0_i32_0 = arith.constant 0 : i32
    %c0_i32_1 = arith.constant 0 : i32
    return %c0_i32, %c0_i32_0 : i32, i32
  }
  func.func @transform_3(%arg0: i32, %arg1: i32) -> (i32, i32) {
    %c0_i32 = arith.constant 0 : i32
    %c0_i32_0 = arith.constant 0 : i32
    %c0_i32_1 = arith.constant 0 : i32
    return %c0_i32, %c0_i32_0 : i32, i32
  }
  func.func @transform_4(%arg0: i32, %arg1: i32) -> (i32, i32, i32) {
    %c0_i32 = arith.constant 0 : i32
    %c0_i32_0 = arith.constant 0 : i32
    return %arg0, %c0_i32, %arg1 : i32, i32, i32
  }
  func.func @transform_5(%arg0: i32, %arg1: i32) -> (i32, i32, i32, i32) {
    %c0_i32 = arith.constant 0 : i32
    %c0_i32_0 = arith.constant 0 : i32
    %c0_i32_1 = arith.constant 0 : i32
    return %arg0, %arg1, %c0_i32, %c0_i32_0 : i32, i32, i32, i32
  }
}

module attributes {stable_mosaic.version = 11 : i64} {
  func.func @_layer_kernel(%arg0: i32, %arg1: i32, %arg2: memref<1x64x16xbf16, #tpu.memory_space<vmem>>, %arg3: memref<64x1xf32, #tpu.memory_space<vmem>>, %arg4: memref<64x1xf32, #tpu.memory_space<vmem>>, %arg5: memref<32x64xbf16, #tpu.memory_space<vmem>>, %arg6: memref<32x1xf32, #tpu.memory_space<vmem>>, %arg7: memref<1x32x16xbf16, #tpu.memory_space<vmem>>, %arg8: memref<1x1x32x2xf32, #tpu.memory_space<vmem>>) attributes {dimension_semantics = [#tpu.dimension_semantics<parallel>, #tpu.dimension_semantics<parallel>], iteration_bounds = array<i64: 2, 1>, scalar_prefetch = 0 : i64, scratch_operands = 0 : i64, tpu.core_type = #tpu.core_type<tc>, window_params = [{transform_indices = @transform_0, window_bounds = array<i64: 1, 64, 16>}, {pipeline_mode = #tpu.pipeline_mode<synchronous>, transform_indices = @transform_1, window_bounds = array<i64: 64, 1>}, {pipeline_mode = #tpu.pipeline_mode<synchronous>, transform_indices = @transform_2, window_bounds = array<i64: 64, 1>}, {pipeline_mode = #tpu.pipeline_mode<synchronous>, transform_indices = @transform_3, window_bounds = array<i64: 32, 64>}, {pipeline_mode = #tpu.pipeline_mode<synchronous>, transform_indices = @transform_4, window_bounds = array<i64: 32, 1>}, {transform_indices = @transform_5, window_bounds = array<i64: 1, 32, 16>}, {transform_indices = @transform_6, window_bounds = array<i64: 1, 1, 32, 2>}]} {
    %c0 = arith.constant 0 : index
    %c0_0 = arith.constant 0 : index
    %c0_1 = arith.constant 0 : index
    %0 = vector.load %arg2[%c0, %c0_0, %c0_1] : memref<1x64x16xbf16, #tpu.memory_space<vmem>>, vector<1x64x16xbf16>
    %1 = vector.shape_cast %0 : vector<1x64x16xbf16> to vector<64x16xbf16>
    %2 = arith.extf %1 : vector<64x16xbf16> to vector<64x16xf32>
    %c0_2 = arith.constant 0 : index
    %c0_3 = arith.constant 0 : index
    %3 = vector.load %arg3[%c0_2, %c0_3] : memref<64x1xf32, #tpu.memory_space<vmem>>, vector<64x1xf32>
    %4 = vector.broadcast %3 : vector<64x1xf32> to vector<64x16xf32>
    %5 = arith.mulf %2, %4 : vector<64x16xf32>
    %c0_4 = arith.constant 0 : index
    %c0_5 = arith.constant 0 : index
    %6 = vector.load %arg4[%c0_4, %c0_5] : memref<64x1xf32, #tpu.memory_space<vmem>>, vector<64x1xf32>
    %7 = vector.broadcast %6 : vector<64x1xf32> to vector<64x16xf32>
    %8 = arith.addf %5, %7 : vector<64x16xf32>
    %cst = arith.constant 0.000000e+00 : f32
    %9 = vector.broadcast %cst : f32 to vector<64x16xf32>
    %10 = arith.maximumf %8, %9 : vector<64x16xf32>
    %11 = arith.truncf %10 : vector<64x16xf32> to vector<64x16xbf16>
    %c0_6 = arith.constant 0 : index
    %c0_7 = arith.constant 0 : index
    %12 = vector.load %arg5[%c0_6, %c0_7] : memref<32x64xbf16, #tpu.memory_space<vmem>>, vector<32x64xbf16>
    %cst_8 = arith.constant dense<0.000000e+00> : vector<32x16xf32>
    %13 = tpu.matmul %12, %11, %cst_8 {dimension_numbers = #tpu.dot_dimension_numbers<[1], [0], [0], [1], [0, 0, 1, 1], [], []>} : vector<32x64xbf16>, vector<64x16xbf16>, vector<32x16xf32> -> vector<32x16xf32>
    %c0_9 = arith.constant 0 : index
    %c0_10 = arith.constant 0 : index
    %14 = vector.load %arg6[%c0_9, %c0_10] : memref<32x1xf32, #tpu.memory_space<vmem>>, vector<32x1xf32>
    %15 = vector.broadcast %14 : vector<32x1xf32> to vector<32x16xf32>
    %16 = arith.addf %13, %15 : vector<32x16xf32>
    %17 = arith.truncf %16 : vector<32x16xf32> to vector<32x16xbf16>
    %c0_11 = arith.constant 0 : index
    %c0_12 = arith.constant 0 : index
    %c0_13 = arith.constant 0 : index
    %18 = vector.load %arg7[%c0_11, %c0_12, %c0_13] : memref<1x32x16xbf16, #tpu.memory_space<vmem>>, vector<1x32x16xbf16>
    %19 = vector.shape_cast %18 : vector<1x32x16xbf16> to vector<32x16xbf16>
    %20 = vector.shape_cast %17 : vector<32x16xbf16> to vector<1x32x16xbf16>
    tpu.vector_store %arg7[%c0_11, %c0_12, %c0_13], %20 {strides = array<i32>} : memref<1x32x16xbf16, #tpu.memory_space<vmem>>, vector<1x32x16xbf16>,
    %cst_14 = arith.constant dense<0.000000e+00> : vector<32xf32>
    %21 = vector.multi_reduction <add>, %16, %cst_14 [1] : vector<32x16xf32> to vector<32xf32>
    %22 = vector.shape_cast %21 : vector<32xf32> to vector<32x1xf32>
    %23 = arith.mulf %16, %16 : vector<32x16xf32>
    %cst_15 = arith.constant dense<0.000000e+00> : vector<32xf32>
    %24 = vector.multi_reduction <add>, %23, %cst_15 [1] : vector<32x16xf32> to vector<32xf32>
    %25 = vector.shape_cast %24 : vector<32xf32> to vector<32x1xf32>
    %26 = tpu.concatenate %22, %25 in 1 : vector<32x1xf32>, vector<32x1xf32> -> vector<32x2xf32>
    %c0_16 = arith.constant 0 : index
    %c0_17 = arith.constant 0 : index
    %c0_18 = arith.constant 0 : index
    %c0_19 = arith.constant 0 : index
    %27 = vector.load %arg8[%c0_16, %c0_17, %c0_18, %c0_19] : memref<1x1x32x2xf32, #tpu.memory_space<vmem>>, vector<1x1x32x2xf32>
    %28 = vector.shape_cast %27 : vector<1x1x32x2xf32> to vector<32x2xf32>
    %29 = vector.shape_cast %26 : vector<32x2xf32> to vector<1x1x32x2xf32>
    tpu.vector_store %arg8[%c0_16, %c0_17, %c0_18, %c0_19], %29 {strides = array<i32>} : memref<1x1x32x2xf32, #tpu.memory_space<vmem>>, vector<1x1x32x2xf32>,
    return
  }
  func.func @transform_0(%arg0: i32, %arg1: i32) -> (i32, i32, i32) {
    %c0_i32 = arith.constant 0 : i32
    %c0_i32_0 = arith.constant 0 : i32
    return %arg0, %c0_i32, %arg1 : i32, i32, i32
  }
  func.func @transform_1(%arg0: i32, %arg1: i32) -> (i32, i32) {
    %c0_i32 = arith.constant 0 : i32
    %c0_i32_0 = arith.constant 0 : i32
    %c0_i32_1 = arith.constant 0 : i32
    return %c0_i32, %c0_i32_0 : i32, i32
  }
  func.func @transform_2(%arg0: i32, %arg1: i32) -> (i32, i32) {
    %c0_i32 = arith.constant 0 : i32
    %c0_i32_0 = arith.constant 0 : i32
    %c0_i32_1 = arith.constant 0 : i32
    return %c0_i32, %c0_i32_0 : i32, i32
  }
  func.func @transform_3(%arg0: i32, %arg1: i32) -> (i32, i32) {
    %c0_i32 = arith.constant 0 : i32
    %c0_i32_0 = arith.constant 0 : i32
    %c0_i32_1 = arith.constant 0 : i32
    return %c0_i32, %c0_i32_0 : i32, i32
  }
  func.func @transform_4(%arg0: i32, %arg1: i32) -> (i32, i32) {
    %c0_i32 = arith.constant 0 : i32
    %c0_i32_0 = arith.constant 0 : i32
    %c0_i32_1 = arith.constant 0 : i32
    return %c0_i32, %c0_i32_0 : i32, i32
  }
  func.func @transform_5(%arg0: i32, %arg1: i32) -> (i32, i32, i32) {
    %c0_i32 = arith.constant 0 : i32
    %c0_i32_0 = arith.constant 0 : i32
    return %arg0, %c0_i32, %arg1 : i32, i32, i32
  }
  func.func @transform_6(%arg0: i32, %arg1: i32) -> (i32, i32, i32, i32) {
    %c0_i32 = arith.constant 0 : i32
    %c0_i32_0 = arith.constant 0 : i32
    %c0_i32_1 = arith.constant 0 : i32
    return %arg0, %arg1, %c0_i32, %c0_i32_0 : i32, i32, i32, i32
  }
}

module attributes {stable_mosaic.version = 11 : i64} {
  func.func @_layer_kernel(%arg0: i32, %arg1: i32, %arg2: memref<1x32x16xbf16, #tpu.memory_space<vmem>>, %arg3: memref<32x1xf32, #tpu.memory_space<vmem>>, %arg4: memref<32x1xf32, #tpu.memory_space<vmem>>, %arg5: memref<16x32xbf16, #tpu.memory_space<vmem>>, %arg6: memref<16x1xf32, #tpu.memory_space<vmem>>, %arg7: memref<1x16x16xbf16, #tpu.memory_space<vmem>>, %arg8: memref<1x1x16x2xf32, #tpu.memory_space<vmem>>) attributes {dimension_semantics = [#tpu.dimension_semantics<parallel>, #tpu.dimension_semantics<parallel>], iteration_bounds = array<i64: 2, 1>, scalar_prefetch = 0 : i64, scratch_operands = 0 : i64, tpu.core_type = #tpu.core_type<tc>, window_params = [{transform_indices = @transform_0, window_bounds = array<i64: 1, 32, 16>}, {pipeline_mode = #tpu.pipeline_mode<synchronous>, transform_indices = @transform_1, window_bounds = array<i64: 32, 1>}, {pipeline_mode = #tpu.pipeline_mode<synchronous>, transform_indices = @transform_2, window_bounds = array<i64: 32, 1>}, {pipeline_mode = #tpu.pipeline_mode<synchronous>, transform_indices = @transform_3, window_bounds = array<i64: 16, 32>}, {pipeline_mode = #tpu.pipeline_mode<synchronous>, transform_indices = @transform_4, window_bounds = array<i64: 16, 1>}, {transform_indices = @transform_5, window_bounds = array<i64: 1, 16, 16>}, {transform_indices = @transform_6, window_bounds = array<i64: 1, 1, 16, 2>}]} {
    %c0 = arith.constant 0 : index
    %c0_0 = arith.constant 0 : index
    %c0_1 = arith.constant 0 : index
    %0 = vector.load %arg2[%c0, %c0_0, %c0_1] : memref<1x32x16xbf16, #tpu.memory_space<vmem>>, vector<1x32x16xbf16>
    %1 = vector.shape_cast %0 : vector<1x32x16xbf16> to vector<32x16xbf16>
    %2 = arith.extf %1 : vector<32x16xbf16> to vector<32x16xf32>
    %c0_2 = arith.constant 0 : index
    %c0_3 = arith.constant 0 : index
    %3 = vector.load %arg3[%c0_2, %c0_3] : memref<32x1xf32, #tpu.memory_space<vmem>>, vector<32x1xf32>
    %4 = vector.broadcast %3 : vector<32x1xf32> to vector<32x16xf32>
    %5 = arith.mulf %2, %4 : vector<32x16xf32>
    %c0_4 = arith.constant 0 : index
    %c0_5 = arith.constant 0 : index
    %6 = vector.load %arg4[%c0_4, %c0_5] : memref<32x1xf32, #tpu.memory_space<vmem>>, vector<32x1xf32>
    %7 = vector.broadcast %6 : vector<32x1xf32> to vector<32x16xf32>
    %8 = arith.addf %5, %7 : vector<32x16xf32>
    %cst = arith.constant 0.000000e+00 : f32
    %9 = vector.broadcast %cst : f32 to vector<32x16xf32>
    %10 = arith.maximumf %8, %9 : vector<32x16xf32>
    %11 = arith.truncf %10 : vector<32x16xf32> to vector<32x16xbf16>
    %c0_6 = arith.constant 0 : index
    %c0_7 = arith.constant 0 : index
    %12 = vector.load %arg5[%c0_6, %c0_7] : memref<16x32xbf16, #tpu.memory_space<vmem>>, vector<16x32xbf16>
    %cst_8 = arith.constant dense<0.000000e+00> : vector<16x16xf32>
    %13 = tpu.matmul %12, %11, %cst_8 {dimension_numbers = #tpu.dot_dimension_numbers<[1], [0], [0], [1], [0, 0, 1, 1], [], []>} : vector<16x32xbf16>, vector<32x16xbf16>, vector<16x16xf32> -> vector<16x16xf32>
    %c0_9 = arith.constant 0 : index
    %c0_10 = arith.constant 0 : index
    %14 = vector.load %arg6[%c0_9, %c0_10] : memref<16x1xf32, #tpu.memory_space<vmem>>, vector<16x1xf32>
    %15 = vector.broadcast %14 : vector<16x1xf32> to vector<16x16xf32>
    %16 = arith.addf %13, %15 : vector<16x16xf32>
    %17 = arith.truncf %16 : vector<16x16xf32> to vector<16x16xbf16>
    %c0_11 = arith.constant 0 : index
    %c0_12 = arith.constant 0 : index
    %c0_13 = arith.constant 0 : index
    %18 = vector.load %arg7[%c0_11, %c0_12, %c0_13] : memref<1x16x16xbf16, #tpu.memory_space<vmem>>, vector<1x16x16xbf16>
    %19 = vector.shape_cast %18 : vector<1x16x16xbf16> to vector<16x16xbf16>
    %20 = vector.shape_cast %17 : vector<16x16xbf16> to vector<1x16x16xbf16>
    tpu.vector_store %arg7[%c0_11, %c0_12, %c0_13], %20 {strides = array<i32>} : memref<1x16x16xbf16, #tpu.memory_space<vmem>>, vector<1x16x16xbf16>,
    %cst_14 = arith.constant dense<0.000000e+00> : vector<16xf32>
    %21 = vector.multi_reduction <add>, %16, %cst_14 [1] : vector<16x16xf32> to vector<16xf32>
    %22 = vector.shape_cast %21 : vector<16xf32> to vector<16x1xf32>
    %23 = arith.mulf %16, %16 : vector<16x16xf32>
    %cst_15 = arith.constant dense<0.000000e+00> : vector<16xf32>
    %24 = vector.multi_reduction <add>, %23, %cst_15 [1] : vector<16x16xf32> to vector<16xf32>
    %25 = vector.shape_cast %24 : vector<16xf32> to vector<16x1xf32>
    %26 = tpu.concatenate %22, %25 in 1 : vector<16x1xf32>, vector<16x1xf32> -> vector<16x2xf32>
    %c0_16 = arith.constant 0 : index
    %c0_17 = arith.constant 0 : index
    %c0_18 = arith.constant 0 : index
    %c0_19 = arith.constant 0 : index
    %27 = vector.load %arg8[%c0_16, %c0_17, %c0_18, %c0_19] : memref<1x1x16x2xf32, #tpu.memory_space<vmem>>, vector<1x1x16x2xf32>
    %28 = vector.shape_cast %27 : vector<1x1x16x2xf32> to vector<16x2xf32>
    %29 = vector.shape_cast %26 : vector<16x2xf32> to vector<1x1x16x2xf32>
    tpu.vector_store %arg8[%c0_16, %c0_17, %c0_18, %c0_19], %29 {strides = array<i32>} : memref<1x1x16x2xf32, #tpu.memory_space<vmem>>, vector<1x1x16x2xf32>,
    return
  }
  func.func @transform_0(%arg0: i32, %arg1: i32) -> (i32, i32, i32) {
    %c0_i32 = arith.constant 0 : i32
    %c0_i32_0 = arith.constant 0 : i32
    return %arg0, %c0_i32, %arg1 : i32, i32, i32
  }
  func.func @transform_1(%arg0: i32, %arg1: i32) -> (i32, i32) {
    %c0_i32 = arith.constant 0 : i32
    %c0_i32_0 = arith.constant 0 : i32
    %c0_i32_1 = arith.constant 0 : i32
    return %c0_i32, %c0_i32_0 : i32, i32
  }
  func.func @transform_2(%arg0: i32, %arg1: i32) -> (i32, i32) {
    %c0_i32 = arith.constant 0 : i32
    %c0_i32_0 = arith.constant 0 : i32
    %c0_i32_1 = arith.constant 0 : i32
    return %c0_i32, %c0_i32_0 : i32, i32
  }
  func.func @transform_3(%arg0: i32, %arg1: i32) -> (i32, i32) {
    %c0_i32 = arith.constant 0 : i32
    %c0_i32_0 = arith.constant 0 : i32
    %c0_i32_1 = arith.constant 0 : i32
    return %c0_i32, %c0_i32_0 : i32, i32
  }
  func.func @transform_4(%arg0: i32, %arg1: i32) -> (i32, i32) {
    %c0_i32 = arith.constant 0 : i32
    %c0_i32_0 = arith.constant 0 : i32
    %c0_i32_1 = arith.constant 0 : i32
    return %c0_i32, %c0_i32_0 : i32, i32
  }
  func.func @transform_5(%arg0: i32, %arg1: i32) -> (i32, i32, i32) {
    %c0_i32 = arith.constant 0 : i32
    %c0_i32_0 = arith.constant 0 : i32
    return %arg0, %c0_i32, %arg1 : i32, i32, i32
  }
  func.func @transform_6(%arg0: i32, %arg1: i32) -> (i32, i32, i32, i32) {
    %c0_i32 = arith.constant 0 : i32
    %c0_i32_0 = arith.constant 0 : i32
    %c0_i32_1 = arith.constant 0 : i32
    return %arg0, %arg1, %c0_i32, %c0_i32_0 : i32, i32, i32, i32
  }
}

module attributes {stable_mosaic.version = 11 : i64} {
  func.func @_layer_kernel(%arg0: i32, %arg1: i32, %arg2: memref<1x16x16xbf16, #tpu.memory_space<vmem>>, %arg3: memref<16x1xf32, #tpu.memory_space<vmem>>, %arg4: memref<16x1xf32, #tpu.memory_space<vmem>>, %arg5: memref<2x16xbf16, #tpu.memory_space<vmem>>, %arg6: memref<2x1xf32, #tpu.memory_space<vmem>>, %arg7: memref<1x2x16xf32, #tpu.memory_space<vmem>>) attributes {dimension_semantics = [#tpu.dimension_semantics<parallel>, #tpu.dimension_semantics<parallel>], iteration_bounds = array<i64: 2, 1>, scalar_prefetch = 0 : i64, scratch_operands = 0 : i64, tpu.core_type = #tpu.core_type<tc>, window_params = [{transform_indices = @transform_0, window_bounds = array<i64: 1, 16, 16>}, {pipeline_mode = #tpu.pipeline_mode<synchronous>, transform_indices = @transform_1, window_bounds = array<i64: 16, 1>}, {pipeline_mode = #tpu.pipeline_mode<synchronous>, transform_indices = @transform_2, window_bounds = array<i64: 16, 1>}, {pipeline_mode = #tpu.pipeline_mode<synchronous>, transform_indices = @transform_3, window_bounds = array<i64: 2, 16>}, {pipeline_mode = #tpu.pipeline_mode<synchronous>, transform_indices = @transform_4, window_bounds = array<i64: 2, 1>}, {transform_indices = @transform_5, window_bounds = array<i64: 1, 2, 16>}]} {
    %c0 = arith.constant 0 : index
    %c0_0 = arith.constant 0 : index
    %c0_1 = arith.constant 0 : index
    %0 = vector.load %arg2[%c0, %c0_0, %c0_1] : memref<1x16x16xbf16, #tpu.memory_space<vmem>>, vector<1x16x16xbf16>
    %1 = vector.shape_cast %0 : vector<1x16x16xbf16> to vector<16x16xbf16>
    %2 = arith.extf %1 : vector<16x16xbf16> to vector<16x16xf32>
    %c0_2 = arith.constant 0 : index
    %c0_3 = arith.constant 0 : index
    %3 = vector.load %arg3[%c0_2, %c0_3] : memref<16x1xf32, #tpu.memory_space<vmem>>, vector<16x1xf32>
    %4 = vector.broadcast %3 : vector<16x1xf32> to vector<16x16xf32>
    %5 = arith.mulf %2, %4 : vector<16x16xf32>
    %c0_4 = arith.constant 0 : index
    %c0_5 = arith.constant 0 : index
    %6 = vector.load %arg4[%c0_4, %c0_5] : memref<16x1xf32, #tpu.memory_space<vmem>>, vector<16x1xf32>
    %7 = vector.broadcast %6 : vector<16x1xf32> to vector<16x16xf32>
    %8 = arith.addf %5, %7 : vector<16x16xf32>
    %cst = arith.constant 0.000000e+00 : f32
    %9 = vector.broadcast %cst : f32 to vector<16x16xf32>
    %10 = arith.maximumf %8, %9 : vector<16x16xf32>
    %11 = arith.truncf %10 : vector<16x16xf32> to vector<16x16xbf16>
    %c0_6 = arith.constant 0 : index
    %c0_7 = arith.constant 0 : index
    %12 = vector.load %arg5[%c0_6, %c0_7] : memref<2x16xbf16, #tpu.memory_space<vmem>>, vector<2x16xbf16>
    %cst_8 = arith.constant dense<0.000000e+00> : vector<2x16xf32>
    %13 = tpu.matmul %12, %11, %cst_8 {dimension_numbers = #tpu.dot_dimension_numbers<[1], [0], [0], [1], [0, 0, 1, 1], [], []>} : vector<2x16xbf16>, vector<16x16xbf16>, vector<2x16xf32> -> vector<2x16xf32>
    %c0_9 = arith.constant 0 : index
    %c0_10 = arith.constant 0 : index
    %14 = vector.load %arg6[%c0_9, %c0_10] : memref<2x1xf32, #tpu.memory_space<vmem>>, vector<2x1xf32>
    %15 = vector.broadcast %14 : vector<2x1xf32> to vector<2x16xf32>
    %16 = arith.addf %13, %15 : vector<2x16xf32>
    %17 = math.tanh %16 : vector<2x16xf32>
    %c0_11 = arith.constant 0 : index
    %c0_12 = arith.constant 0 : index
    %c0_13 = arith.constant 0 : index
    %18 = vector.load %arg7[%c0_11, %c0_12, %c0_13] : memref<1x2x16xf32, #tpu.memory_space<vmem>>, vector<1x2x16xf32>
    %19 = vector.shape_cast %18 : vector<1x2x16xf32> to vector<2x16xf32>
    %20 = vector.shape_cast %17 : vector<2x16xf32> to vector<1x2x16xf32>
    tpu.vector_store %arg7[%c0_11, %c0_12, %c0_13], %20 {strides = array<i32>} : memref<1x2x16xf32, #tpu.memory_space<vmem>>, vector<1x2x16xf32>,
    return
  }
  func.func @transform_0(%arg0: i32, %arg1: i32) -> (i32, i32, i32) {
    %c0_i32 = arith.constant 0 : i32
    %c0_i32_0 = arith.constant 0 : i32
    return %arg0, %c0_i32, %arg1 : i32, i32, i32
  }
  func.func @transform_1(%arg0: i32, %arg1: i32) -> (i32, i32) {
    %c0_i32 = arith.constant 0 : i32
    %c0_i32_0 = arith.constant 0 : i32
    %c0_i32_1 = arith.constant 0 : i32
    return %c0_i32, %c0_i32_0 : i32, i32
  }
  func.func @transform_2(%arg0: i32, %arg1: i32) -> (i32, i32) {
    %c0_i32 = arith.constant 0 : i32
    %c0_i32_0 = arith.constant 0 : i32
    %c0_i32_1 = arith.constant 0 : i32
    return %c0_i32, %c0_i32_0 : i32, i32
  }
  func.func @transform_3(%arg0: i32, %arg1: i32) -> (i32, i32) {
    %c0_i32 = arith.constant 0 : i32
    %c0_i32_0 = arith.constant 0 : i32
    %c0_i32_1 = arith.constant 0 : i32
    return %c0_i32, %c0_i32_0 : i32, i32
  }
  func.func @transform_4(%arg0: i32, %arg1: i32) -> (i32, i32) {
    %c0_i32 = arith.constant 0 : i32
    %c0_i32_0 = arith.constant 0 : i32
    %c0_i32_1 = arith.constant 0 : i32
    return %c0_i32, %c0_i32_0 : i32, i32
  }
  func.func @transform_5(%arg0: i32, %arg1: i32) -> (i32, i32, i32) {
    %c0_i32 = arith.constant 0 : i32
    %c0_i32_0 = arith.constant 0 : i32
    return %arg0, %c0_i32, %arg1 : i32, i32, i32
  }
}

</mosaic_0001>

<llo_original>
// kernel: pointgencon_forward.4
$region0: #{pointgencon_forward.4}
  #allocation0 [shape = 'u32[]', space=smem, size = 0x4, offset = 0x4, fixed_abs, tag = 'smem constant byte address 0x4 - core index']
  #allocation1 [shape = 'u32[144,128]{1,0:T(1,128)}', space=vmem, size = 0x12000, scoped, tag = 'internal scratch']
  %s0 = inlined_call_operand.vmem [shape: f32[2,32,16], index: 0, kind: input, shape index: {}]
  %s1 = inlined_call_operand.vmem [shape: f32[2,32,16], index: 1, kind: input, shape index: {}]
  %s2 = inlined_call_operand.vmem [shape: bf16[64,64], index: 2, kind: input, shape index: {}]
  %s3 = inlined_call_operand.vmem [shape: f32[64,1], index: 3, kind: input, shape index: {}]
  %s4 = inlined_call_operand.vmem [shape: bf16[2,64,16], index: 4, kind: output, shape index: {0}]
  %s5 = inlined_call_operand.vmem [shape: f32[2,1,64,2], index: 5, kind: output, shape index: {1}]
  %6 = xla_tuple %s4, %s5
  %s7 = sld [smem:[#allocation0]]
  $region57: #{pointgencon_forward.4} parent=0
    _
  %s9 = ssub.s32 1, %s7
  %s10 = scalar_select 0, %s9, %s7
  loop: start=0, step=1, limit=4
  $region2: #{pointgencon_forward.4} parent=0 // loop_pre_header
    _
  $region3: #{pointgencon_forward.4} parent=0 // loop_header
    %s12 = sphi 0, %s16
    %p13 = scmp.ge.s32.totalorder %s12, 4
    %s19 = sphi 0, %s31
    %s20 = sphi 0, %s27
    %s21 = sphi 0, %s19
    %s22 = sphi 0, %s20
    %s23 = sphi 0, %s21
    %s24 = sphi 0, %s22
    %s36 = sphi 0, %s38
    %s39 = sphi 0, %s36
    %s40 = sphi 0, %s39
    %s56 = sphi 0, %s40
    %s64 = sphi 0, %s66
    %s67 = sphi 0, %s64
    %s68 = sphi 0, %s67
    %s84 = sphi 0, %s68
    %s88 = sphi 0, %s88
    %s90 = sphi 0, %s88
    %s91 = sphi 0, %s90
    %s105 = sphi 0, %s91
    %s109 = sphi 0, %s109
    %s111 = sphi 0, %s109
    %s112 = sphi 0, %s111
    %s126 = sphi 0, %s112
    %s134 = sphi 0, %s136
    %s137 = sphi 0, %s134
    %s138 = sphi 0, %s137
    %s154 = sphi 0, %s138
    %s162 = sphi 0, %s164
    %s165 = sphi 0, %s162
    %s166 = sphi 0, %s165
    %s182 = sphi 0, %s166
  $region4: #{pointgencon_forward.4} parent=0 // loop_header_branch
    %15 = sbr.rel (%p13) target = $region8
  $region5: #{pointgencon_forward.4} parent=0 // loop_body
    %s17 = ssub.s32 %s12, 1
    %s18 = ssub.s32 %s12, 2
    %s25 = sadd.s32 1, %s20
    %p26 = scmp.ge.s32.totalorder %s25, 1
    %s27 = scalar_select %p26, 0, %s25
    %s28 = sadd.s32 1, %s19
    %s29 = scalar_select %p26, %s28, %s19
    %p30 = scmp.ge.s32.totalorder %s29, 2
    %s31 = scalar_select %p30, 0, %s29
    %s32 = ssub.s32 %s19, %s31
    %s33 = ssub.s32 %s20, %s27
    %s34 = sor.u32 %s32, %s33
    %p35 = scmp.eq.s32.totalorder %s34, 0
    %s37 = sadd.s32 %s36, 1
    %s38 = scalar_select %p35, %s36, %s37
    %p41 = pneg %p35
    %p42 = scmp.eq.s32.totalorder %s12, 1
    %p43 = por %p41, %p42
    %p44 = scmp.ne.s32.totalorder %s36, %s39
    %p45 = scmp.eq.s32.totalorder %s12, 0
    %p46 = por %p44, %p45
    %p47 = scmp.ne.s32.totalorder %s36, %s39
    %p48 = scmp.eq.s32.totalorder %s17, 1
    %p49 = por %p47, %p48
    %p50 = scmp.ne.s32.totalorder %s39, %s40
    %p51 = scmp.eq.s32.totalorder %s17, 0
    %p52 = por %p50, %p51
    %p53 = scmp.ne.s32.totalorder %s39, %s40
    %p54 = scmp.eq.s32.totalorder %s18, 1
    %p55 = por %p53, %p54
    %p57 = scmp.ne.s32.totalorder %s40, %s56
    %p58 = scmp.eq.s32.totalorder %s18, 0
    %p59 = por %p57, %p58
    %s60 = ssub.s32 %s19, %s31
    %s61 = ssub.s32 %s20, %s27
    %s62 = sor.u32 %s60, %s61
    %p63 = scmp.eq.s32.totalorder %s62, 0
    %s65 = sadd.s32 %s64, 1
    %s66 = scalar_select %p63, %s64, %s65
    %p69 = pneg %p63
    %p70 = scmp.eq.s32.totalorder %s12, 1
    %p71 = por %p69, %p70
    %p72 = scmp.ne.s32.totalorder %s64, %s67
    %p73 = scmp.eq.s32.totalorder %s12, 0
    %p74 = por %p72, %p73
    %p75 = scmp.ne.s32.totalorder %s64, %s67
    %p76 = scmp.eq.s32.totalorder %s17, 1
    %p77 = por %p75, %p76
    %p78 = scmp.ne.s32.totalorder %s67, %s68
    %p79 = scmp.eq.s32.totalorder %s17, 0
    %p80 = por %p78, %p79
    %p81 = scmp.ne.s32.totalorder %s67, %s68
    %p82 = scmp.eq.s32.totalorder %s18, 1
    %p83 = por %p81, %p82
    %p85 = scmp.ne.s32.totalorder %s68, %s84
    %p86 = scmp.eq.s32.totalorder %s18, 0
    %p87 = por %p85, %p86
    %s89 = sadd.s32 %s88, 1
    %p92 = scmp.eq.s32.totalorder %s12, 1
    %p93 = scmp.ne.s32.totalorder %s88, %s90
    %p94 = scmp.eq.s32.totalorder %s12, 0
    %p95 = por %p93, %p94
    %p96 = scmp.ne.s32.totalorder %s88, %s90
    %p97 = scmp.eq.s32.totalorder %s17, 1
    %p98 = por %p96, %p97
    %p99 = scmp.ne.s32.totalorder %s90, %s91
    %p100 = scmp.eq.s32.totalorder %s17, 0
    %p101 = por %p99, %p100
    %p102 = scmp.ne.s32.totalorder %s90, %s91
    %p103 = scmp.eq.s32.totalorder %s18, 1
    %p104 = por %p102, %p103
    %p106 = scmp.ne.s32.totalorder %s91, %s105
    %p107 = scmp.eq.s32.totalorder %s18, 0
    %p108 = por %p106, %p107
    %s110 = sadd.s32 %s109, 1
    %p113 = scmp.eq.s32.totalorder %s12, 1
    %p114 = scmp.ne.s32.totalorder %s109, %s111
    %p115 = scmp.eq.s32.totalorder %s12, 0
    %p116 = por %p114, %p115
    %p117 = scmp.ne.s32.totalorder %s109, %s111
    %p118 = scmp.eq.s32.totalorder %s17, 1
    %p119 = por %p117, %p118
    %p120 = scmp.ne.s32.totalorder %s111, %s112
    %p121 = scmp.eq.s32.totalorder %s17, 0
    %p122 = por %p120, %p121
    %p123 = scmp.ne.s32.totalorder %s111, %s112
    %p124 = scmp.eq.s32.totalorder %s18, 1
    %p125 = por %p123, %p124
    %p127 = scmp.ne.s32.totalorder %s112, %s126
    %p128 = scmp.eq.s32.totalorder %s18, 0
    %p129 = por %p127, %p128
    %s130 = ssub.s32 %s19, %s31
    %s131 = ssub.s32 %s20, %s27
    %s132 = sor.u32 %s130, %s131
    %p133 = scmp.eq.s32.totalorder %s132, 0
    %s135 = sadd.s32 %s134, 1
    %s136 = scalar_select %p133, %s134, %s135
    %p139 = pneg %p133
    %p140 = scmp.eq.s32.totalorder %s12, 1
    %p141 = por %p139, %p140
    %p142 = scmp.ne.s32.totalorder %s134, %s137
    %p143 = scmp.eq.s32.totalorder %s12, 0
    %p144 = por %p142, %p143
    %p145 = scmp.ne.s32.totalorder %s134, %s137
    %p146 = scmp.eq.s32.totalorder %s17, 1
    %p147 = por %p145, %p146
    %p148 = scmp.ne.s32.totalorder %s137, %s138
    %p149 = scmp.eq.s32.totalorder %s17, 0
    %p150 = por %p148, %p149
    %p151 = scmp.ne.s32.totalorder %s137, %s138
    %p152 = scmp.eq.s32.totalorder %s18, 1
    %p153 = por %p151, %p152
    %p155 = scmp.ne.s32.totalorder %s138, %s154
    %p156 = scmp.eq.s32.totalorder %s18, 0
    %p157 = por %p155, %p156
    %s158 = ssub.s32 %s19, %s31
    %s159 = ssub.s32 %s20, %s27
    %s160 = sor.u32 %s158, %s159
    %p161 = scmp.eq.s32.totalorder %s160, 0
    %s163 = sadd.s32 %s162, 1
    %s164 = scalar_select %p161, %s162, %s163
    %p167 = pneg %p161
    %p168 = scmp.eq.s32.totalorder %s12, 1
    %p169 = por %p167, %p168
    %p170 = scmp.ne.s32.totalorder %s162, %s165
    %p171 = scmp.eq.s32.totalorder %s12, 0
    %p172 = por %p170, %p171
    %p173 = scmp.ne.s32.totalorder %s162, %s165
    %p174 = scmp.eq.s32.totalorder %s17, 1
    %p175 = por %p173, %p174
    %p176 = scmp.ne.s32.totalorder %s165, %s166
    %p177 = scmp.eq.s32.totalorder %s17, 0
    %p178 = por %p176, %p177
    %p179 = scmp.ne.s32.totalorder %s165, %s166
    %p180 = scmp.eq.s32.totalorder %s18, 1
    %p181 = por %p179, %p180
    %p183 = scmp.ne.s32.totalorder %s166, %s182
    %p184 = scmp.eq.s32.totalorder %s18, 0
    %p185 = por %p183, %p184
    %p186 = scmp.le.s32.totalorder 1, %s12
    %p187 = scmp.lt.s32.totalorder %s12, 3
    %p188 = pnand %p186, %p187
    %p189 = pneg %p188
    // Predicated region
    $region9: #{pointgencon_forward.4} parent=5 // pred_check
      _
    $region10: #{pointgencon_forward.4} parent=5 // pred_check_branch
      %191 = sbr.rel (%p188) target = $region12
    $region11: #{pointgencon_forward.4} parent=5 // pred_region
      %s192 = ssub.s32 %s12, 1
      // Predicated region
      $region13: #{pointgencon_forward.4} parent=11 // pred_check
        %p193 = pneg %p101
      $region14: #{pointgencon_forward.4} parent=11 // pred_check_branch
        %195 = sbr.rel (%p193) target = $region16
      $region15: #{pointgencon_forward.4} parent=11 // pred_region
        _
      $region16: #{pointgencon_forward.4} parent=11 // pred_fallthru
        _
      // Predicated region
      $region17: #{pointgencon_forward.4} parent=11 // pred_check
        %p196 = pneg %p122
      $region18: #{pointgencon_forward.4} parent=11 // pred_check_branch
        %198 = sbr.rel (%p196) target = $region20
      $region19: #{pointgencon_forward.4} parent=11 // pred_region
        _
      $region20: #{pointgencon_forward.4} parent=11 // pred_fallthru
        _
    $region12: #{pointgencon_forward.4} parent=5 // pred_fallthru
      _
    %p199 = scmp.lt.s32.totalorder %s12, 2
    // Predicated region
    $region21: #{pointgencon_forward.4} parent=5 // pred_check
      %p200 = pneg %p199
    $region22: #{pointgencon_forward.4} parent=5 // pred_check_branch
      %202 = sbr.rel (%p200) target = $region24
    $region23: #{pointgencon_forward.4} parent=5 // pred_region
      // Predicated region
      $region25: #{pointgencon_forward.4} parent=23 // pred_check
        %p203 = pneg %p46
      $region26: #{pointgencon_forward.4} parent=23 // pred_check_branch
        %205 = sbr.rel (%p203) target = $region28
      $region27: #{pointgencon_forward.4} parent=23 // pred_region
        %p206 = scmp.lt.s32.totalorder %s19, 1
        %s207 = scalar_select %p206, %s19, 1
        %p208 = scmp.lt.s32.totalorder %s20, 0
        %s209 = scalar_select %p208, %s20, 0
        %s210 = smul.addr %s207, 4
        %s211 = sadd.s32 %s209, %s210
        %s212 = smul.addr %s211, 8
        %s213 = scalar_lea.vmem %s0, %s212
      $region28: #{pointgencon_forward.4} parent=23 // pred_fallthru
        _
      // Predicated region
      $region29: #{pointgencon_forward.4} parent=23 // pred_check
        %p214 = pneg %p74
      $region30: #{pointgencon_forward.4} parent=23 // pred_check_branch
        %216 = sbr.rel (%p214) target = $region32
      $region31: #{pointgencon_forward.4} parent=23 // pred_region
        %p217 = scmp.lt.s32.totalorder %s19, 1
        %s218 = scalar_select %p217, %s19, 1
        %p219 = scmp.lt.s32.totalorder %s20, 0
        %s220 = scalar_select %p219, %s20, 0
        %s221 = smul.addr %s218, 4
        %s222 = sadd.s32 %s220, %s221
        %s223 = smul.addr %s222, 8
        %s224 = scalar_lea.vmem %s1, %s223
      $region32: #{pointgencon_forward.4} parent=23 // pred_fallthru
        _
    $region24: #{pointgencon_forward.4} parent=5 // pred_fallthru
      _
    %p225 = scmp.le.s32.totalorder 1, %s12
    %p226 = scmp.lt.s32.totalorder %s12, 3
    %p227 = pnand %p225, %p226
    %p228 = pneg %p227
    // Predicated region
    $region33: #{pointgencon_forward.4} parent=5 // pred_check
      _
    $region34: #{pointgencon_forward.4} parent=5 // pred_check_branch
      %230 = sbr.rel (%p227) target = $region36
    $region35: #{pointgencon_forward.4} parent=5 // pred_region
      %s231 = ssub.s32 %s12, 1
      %p232 = scmp.lt.s32.totalorder %s21, 1
      %s233 = scalar_select %p232, %s21, 1
      %p234 = scmp.lt.s32.totalorder %s22, 0
      %s235 = scalar_select %p234, %s22, 0
      %s236 = smul.addr %s233, 4
      %s237 = sadd.s32 %s235, %s236
      %s238 = smul.addr %s237, 8
      %s239 = scalar_lea.vmem %s0, %s238
      %p240 = pneg %p52
      %p241 = pneg %p49
      %p242 = scmp.lt.s32.totalorder %s21, 1
      %s243 = scalar_select %p242, %s21, 1
      %p244 = scmp.lt.s32.totalorder %s22, 0
      %s245 = scalar_select %p244, %s22, 0
      %s246 = smul.addr %s243, 4
      %s247 = sadd.s32 %s245, %s246
      %s248 = smul.addr %s247, 8
      %s249 = scalar_lea.vmem %s1, %s248
      %p250 = pneg %p80
      %p251 = pneg %p77
      %p252 = pneg %p101
      %p253 = pneg %p98
      %p254 = pneg %p122
      %p255 = pneg %p119
      %p256 = pneg %p150
      %p257 = pneg %p147
      %p258 = scmp.lt.s32.totalorder %s21, 1
      %s259 = scalar_select %p258, %s21, 1
      %p260 = scmp.lt.s32.totalorder %s22, 0
      %s261 = scalar_select %p260, %s22, 0
      %s262 = smul.addr %s259, 8
      %s263 = sadd.s32 %s261, %s262
      %s264 = smul.addr %s263, 4
      %s265 = scalar_lea.vmem %s4, %s264
      %p266 = pneg %p178
      %p267 = pneg %p175
      %p268 = scmp.lt.s32.totalorder %s21, 1
      %s269 = scalar_select %p268, %s21, 1
      %p270 = scmp.lt.s32.totalorder %s22, 0
      %s271 = scalar_select %p270, %s22, 0
      %s272 = smul.addr %s271, 8
      %s273 = smul.addr %s269, 8
      %s274 = sadd.s32 %s272, %s273
      %s275 = smul.addr %s274, 8
      %s276 = scalar_lea.vmem %s5, %s275
      %p277 = scmp.lt.s32.totalorder %s21, 1
      %s278 = scalar_select %p277, %s21, 1
      %p279 = scmp.lt.s32.totalorder %s22, 0
      %s280 = scalar_select %p279, %s22, 0
      %s281 = smul.addr %s278, 4
      %s282 = sadd.s32 %s280, %s281
      %s283 = smul.addr %s282, 8
      %s284 = scalar_lea.vmem %s0, %s283
      %p285 = scmp.lt.s32.totalorder %s21, 1
      %s286 = scalar_select %p285, %s21, 1
      %p287 = scmp.lt.s32.totalorder %s22, 0
      %s288 = scalar_select %p287, %s22, 0
      %s289 = smul.addr %s286, 4
      %s290 = sadd.s32 %s288, %s289
      %s291 = smul.addr %s290, 8
      %s292 = scalar_lea.vmem %s1, %s291
      %p293 = scmp.lt.s32.totalorder %s21, 1
      %s294 = scalar_select %p293, %s21, 1
      %p295 = scmp.lt.s32.totalorder %s22, 0
      %s296 = scalar_select %p295, %s22, 0
      %s297 = smul.addr %s294, 8
      %s298 = sadd.s32 %s296, %s297
      %s299 = smul.addr %s298, 4
      %s300 = scalar_lea.vmem %s4, %s299
      %p301 = scmp.lt.s32.totalorder %s21, 1
      %s302 = scalar_select %p301, %s21, 1
      %p303 = scmp.lt.s32.totalorder %s22, 0
      %s304 = scalar_select %p303, %s22, 0
      %s305 = smul.addr %s304, 8
      %s306 = smul.addr %s302, 8
      %s307 = sadd.s32 %s305, %s306
      %s308 = smul.addr %s307, 8
      %s309 = scalar_lea.vmem %s5, %s308
      %v311 = vld [vmem:[%s284] sm:$0xff]
      %v312 = vld [vmem:[%s284 + $0x8] sm:$0xff]
      %v313 = vld [vmem:[%s284 + $0x10] sm:$0xff]
      %v314 = vld [vmem:[%s284 + $0x18] sm:$0xff]
      %v315 = vpack.c.bf16 %v312, %v311
      %v316 = vpack.c.bf16 %v314, %v313
      %v317 = vld [vmem:[%s292] sm:$0xff]
      %v318 = vld [vmem:[%s292 + $0x8] sm:$0xff]
      %v319 = vld [vmem:[%s292 + $0x10] sm:$0xff]
      %v320 = vld [vmem:[%s292 + $0x18] sm:$0xff]
      %v321 = vpack.c.bf16 %v318, %v317
      %v322 = vpack.c.bf16 %v320, %v319
      %v323 = vld [vmem:[%s2] sm:$0xf]
      %v324 = vld [vmem:[%s2 + $0x4] sm:$0xf]
      %v325 = vld [vmem:[%s2 + $0x8] sm:$0xf]
      %v326 = vld [vmem:[%s2 + $0xc] sm:$0xf]
      %v327 = vld [vmem:[%s2 + $0x10] sm:$0xf]
      %v328 = vld [vmem:[%s2 + $0x14] sm:$0xf]
      %v329 = vld [vmem:[%s2 + $0x18] sm:$0xf]
      %v330 = vld [vmem:[%s2 + $0x1c] sm:$0xf]
      %v331 = vld [vmem:[%s3] sm:$0xff]
      %v332 = vld [vmem:[%s3 + $0x8] sm:$0xff]
      %v333 = vld [vmem:[%s3 + $0x10] sm:$0xff]
      %v334 = vld [vmem:[%s3 + $0x18] sm:$0xff]
      %v335 = vld [vmem:[%s3 + $0x20] sm:$0xff]
      %v336 = vld [vmem:[%s3 + $0x28] sm:$0xff]
      %v337 = vld [vmem:[%s3 + $0x30] sm:$0xff]
      %v338 = vld [vmem:[%s3 + $0x38] sm:$0xff]
      %340 = vset.pattern.permute.xlu0 0
      %341 = vperm.xlu0 %340, %v331
      %v342 = vpop.permute.xlu0 %341
      %345 = vset.pattern.permute.xlu0 0
      %346 = vperm.xlu0 %345, %v332
      %v347 = vpop.permute.xlu0 %346
      %350 = vset.pattern.permute.xlu0 0
      %351 = vperm.xlu0 %350, %v333
      %v352 = vpop.permute.xlu0 %351
      %355 = vset.pattern.permute.xlu0 0
      %356 = vperm.xlu0 %355, %v334
      %v357 = vpop.permute.xlu0 %356
      %360 = vset.pattern.permute.xlu0 0
      %361 = vperm.xlu0 %360, %v335
      %v362 = vpop.permute.xlu0 %361
      %365 = vset.pattern.permute.xlu0 0
      %366 = vperm.xlu0 %365, %v336
      %v367 = vpop.permute.xlu0 %366
      %370 = vset.pattern.permute.xlu0 0
      %371 = vperm.xlu0 %370, %v337
      %v372 = vpop.permute.xlu0 %371
      %375 = vset.pattern.permute.xlu0 0
      %376 = vperm.xlu0 %375, %v338
      %v377 = vpop.permute.xlu0 %376
      %v387 = vunpack.c.l.b16 %v323
      %v388 = vunpack.c.l.b16 %v324
      %v389 = vunpack.c.l.b16 %v325
      %v390 = vunpack.c.l.b16 %v326
      %v391 = vunpack.c.l.b16 %v327
      %v392 = vunpack.c.l.b16 %v328
      %v393 = vunpack.c.l.b16 %v329
      %v394 = vunpack.c.l.b16 %v330
      %v395 = vpack.c.b16 %v388, %v387
      %v396 = vpack.c.b16 %v390, %v389
      %v397 = vpack.c.b16 %v392, %v391
      %v398 = vpack.c.b16 %v394, %v393
      %vm399 = vcmask 523264
      %v401 = vsel %vm399, %v395, 0
      %v404 = vsel %vm399, %v396, 0
      %v407 = vsel %vm399, %v397, 0
      %v410 = vsel %vm399, %v398, 0
      %412 = vmatprep.subr.bf16.mxu0 0
      %413 = vmatpush1.bf16.msra.mxu0 %v315
      %414 = vmatprep.subr.bf16.mxu0 0
      %415 = vmatpush1.bf16.msra.mxu0 %v316
      %416 = vmatprep.subr.bf16.mxu0 0
      %417 = vmatpush1.bf16.msra.mxu0 %v321
      %418 = vmatprep.subr.bf16.mxu0 0
      %419 = vmatpush1.bf16.msra.mxu0 %v322
      %420 = vmatprep.subr.bf16.mxu0 0
      %421 = vmatpush1.bf16.msra.mxu0 0
      %422 = vmatprep.subr.bf16.mxu0 0
      %423 = vmatpush1.bf16.msra.mxu0 0
      %424 = vmatprep.subr.bf16.mxu0 0
      %425 = vmatpush1.bf16.msra.mxu0 0
      %426 = vmatprep.subr.bf16.mxu0 0
      %427 = vmatpush1.bf16.msra.mxu0 0
      %428 = vmatprep.subr.bf16.mxu0 0
      %429 = vmatpush1.bf16.msra.mxu0 0
      %430 = vmatprep.subr.bf16.mxu0 0
      %431 = vmatpush1.bf16.msra.mxu0 0
      %432 = vmatprep.subr.bf16.mxu0 0
      %433 = vmatpush1.bf16.msra.mxu0 0
      %434 = vmatprep.subr.bf16.mxu0 0
      %435 = vmatpush1.bf16.msra.mxu0 0
      %436 = vmatprep.subr.bf16.mxu0 0
      %437 = vmatpush1.bf16.msra.mxu0 0
      %438 = vmatprep.subr.bf16.mxu0 0
      %439 = vmatpush1.bf16.msra.mxu0 0
      %440 = vmatprep.subr.bf16.mxu0 0
      %441 = vmatpush1.bf16.msra.mxu0 0
      %442 = vmatprep.subr.bf16.mxu0 0
      %443 = vmatpush1.bf16.msra.mxu0 0
      %444 = vmatprep.mubr.bf16.mxu0 0
      %445 = vmatmul.mubr.bf16.gmra.mrb[0].mxu0 %v401
      %v446 = vpop.f32.mrb[0].mxu0
      %v447 = vadd.f32 %v342, %v446
      %v448 = vpop.f32.mrb[0].mxu0
      %v449 = vpop.f32.mrb[0].mxu0
      %v450 = vadd.f32 %v347, %v449
      %v451 = vpop.f32.mrb[0].mxu0
      %452 = vmatprep.mubr.bf16.mxu0 0
      %453 = vmatmul.mubr.bf16.gmra.mrb[0].mxu0 %v404
      %v454 = vpop.f32.mrb[0].mxu0
      %v455 = vadd.f32 %v352, %v454
      %v456 = vpop.f32.mrb[0].mxu0
      %v457 = vpop.f32.mrb[0].mxu0
      %v458 = vadd.f32 %v357, %v457
      %v459 = vpop.f32.mrb[0].mxu0
      %460 = vmatprep.mubr.bf16.mxu0 0
      %461 = vmatmul.mubr.bf16.gmra.mrb[0].mxu0 %v407
      %v462 = vpop.f32.mrb[0].mxu0
      %v463 = vadd.f32 %v362, %v462
      %v464 = vpop.f32.mrb[0].mxu0
      %v465 = vpop.f32.mrb[0].mxu0
      %v466 = vadd.f32 %v367, %v465
      %v467 = vpop.f32.mrb[0].mxu0
      %468 = vmatprep.mubr.bf16.mxu0 0
      %469 = vmatmul.mubr.bf16.gmra.mrb[0].mxu0 %v410
      %v470 = vpop.f32.mrb[0].mxu0
      %v471 = vadd.f32 %v372, %v470
      %v472 = vpop.f32.mrb[0].mxu0
      %v473 = vpop.f32.mrb[0].mxu0
      %v474 = vadd.f32 %v377, %v473
      %v475 = vpop.f32.mrb[0].mxu0
      %476 = vdwg.mxu0
      %v477 = vpack.c.bf16 %v450, %v447
      %v478 = vpack.c.bf16 %v458, %v455
      %v479 = vpack.c.bf16 %v466, %v463
      %v480 = vpack.c.bf16 %v474, %v471
      %v485 = vunpack.c.l.b16 %v477
      %v486 = vunpack.c.h.b16 %v477
      %v487 = vunpack.c.l.b16 %v478
      %v488 = vunpack.c.h.b16 %v478
      %v489 = vunpack.c.l.b16 %v479
      %v490 = vunpack.c.h.b16 %v479
      %v491 = vunpack.c.l.b16 %v480
      %v492 = vunpack.c.h.b16 %v480
      %v493 = vpack.c.b16 %v485, %v485
      %v494 = vpack.c.b16 %v486, %v486
      %v495 = vpack.c.b16 %v487, %v487
      %v496 = vpack.c.b16 %v488, %v488
      %v497 = vpack.c.b16 %v489, %v489
      %v498 = vpack.c.b16 %v490, %v490
      %v499 = vpack.c.b16 %v491, %v491
      %v500 = vpack.c.b16 %v492, %v492
      %vm509 = vcmask 125952
      %510 = vst.msk [vmem:[%s300] sm:$0xf] %vm509, %v493
      %511 = vst.msk [vmem:[%s300 + $0x4] sm:$0xf] %vm509, %v494
      %512 = vst.msk [vmem:[%s300 + $0x8] sm:$0xf] %vm509, %v495
      %513 = vst.msk [vmem:[%s300 + $0xc] sm:$0xf] %vm509, %v496
      %514 = vst.msk [vmem:[%s300 + $0x10] sm:$0xf] %vm509, %v497
      %515 = vst.msk [vmem:[%s300 + $0x14] sm:$0xf] %vm509, %v498
      %516 = vst.msk [vmem:[%s300 + $0x18] sm:$0xf] %vm509, %v499
      %517 = vst.msk [vmem:[%s300 + $0x1c] sm:$0xf] %vm509, %v500
      %vm518 = vcmask 130048
      %v519 = vsel %vm518, %v447, 0.0
      %520 = vadd.xlane.f32.xlu0 %v519
      %v521 = vpop.xlane.xlu0 %520
      %v522 = vsel %vm518, %v450, 0.0
      %523 = vadd.xlane.f32.xlu0 %v522
      %v524 = vpop.xlane.xlu0 %523
      %v525 = vsel %vm518, %v455, 0.0
      %526 = vadd.xlane.f32.xlu0 %v525
      %v527 = vpop.xlane.xlu0 %526
      %v528 = vsel %vm518, %v458, 0.0
      %529 = vadd.xlane.f32.xlu0 %v528
      %v530 = vpop.xlane.xlu0 %529
      %v531 = vsel %vm518, %v463, 0.0
      %532 = vadd.xlane.f32.xlu0 %v531
      %v533 = vpop.xlane.xlu0 %532
      %v534 = vsel %vm518, %v466, 0.0
      %535 = vadd.xlane.f32.xlu0 %v534
      %v536 = vpop.xlane.xlu0 %535
      %v537 = vsel %vm518, %v471, 0.0
      %538 = vadd.xlane.f32.xlu0 %v537
      %v539 = vpop.xlane.xlu0 %538
      %v540 = vsel %vm518, %v474, 0.0
      %541 = vadd.xlane.f32.xlu0 %v540
      %v542 = vpop.xlane.xlu0 %541
      %v543 = vmul.f32 %v447, %v447
      %v544 = vmul.f32 %v450, %v450
      %v545 = vmul.f32 %v455, %v455
      %v546 = vmul.f32 %v458, %v458
      %v547 = vmul.f32 %v463, %v463
      %v548 = vmul.f32 %v466, %v466
      %v549 = vmul.f32 %v471, %v471
      %v550 = vmul.f32 %v474, %v474
      %v551 = vsel %vm518, %v543, 0.0
      %552 = vadd.xlane.f32.xlu0 %v551
      %v553 = vpop.xlane.xlu0 %552
      %v554 = vsel %vm518, %v544, 0.0
      %555 = vadd.xlane.f32.xlu0 %v554
      %v556 = vpop.xlane.xlu0 %555
      %v557 = vsel %vm518, %v545, 0.0
      %558 = vadd.xlane.f32.xlu0 %v557
      %v559 = vpop.xlane.xlu0 %558
      %v560 = vsel %vm518, %v546, 0.0
      %561 = vadd.xlane.f32.xlu0 %v560
      %v562 = vpop.xlane.xlu0 %561
      %v563 = vsel %vm518, %v547, 0.0
      %564 = vadd.xlane.f32.xlu0 %v563
      %v565 = vpop.xlane.xlu0 %564
      %v566 = vsel %vm518, %v548, 0.0
      %567 = vadd.xlane.f32.xlu0 %v566
      %v568 = vpop.xlane.xlu0 %567
      %v569 = vsel %vm518, %v549, 0.0
      %570 = vadd.xlane.f32.xlu0 %v569
      %v571 = vpop.xlane.xlu0 %570
      %v572 = vsel %vm518, %v550, 0.0
      %573 = vadd.xlane.f32.xlu0 %v572
      %v574 = vpop.xlane.xlu0 %573
      %vm575 = vcmask 7168
      %v576 = vsel %vm575, %v521, %v553
      %v577 = vsel %vm575, %v524, %v556
      %v578 = vsel %vm575, %v527, %v559
      %v579 = vsel %vm575, %v530, %v562
      %v580 = vsel %vm575, %v533, %v565
      %v581 = vsel %vm575, %v536, %v568
      %v582 = vsel %vm575, %v539, %v571
      %v583 = vsel %vm575, %v542, %v574
      %vm584 = vcmask 15360
      %585 = vst.msk [vmem:[%s309] sm:$0xff] %vm584, %v576
      %586 = vst.msk [vmem:[%s309 + $0x8] sm:$0xff] %vm584, %v577
      %587 = vst.msk [vmem:[%s309 + $0x10] sm:$0xff] %vm584, %v578
      %588 = vst.msk [vmem:[%s309 + $0x18] sm:$0xff] %vm584, %v579
      %589 = vst.msk [vmem:[%s309 + $0x20] sm:$0xff] %vm584, %v580
      %590 = vst.msk [vmem:[%s309 + $0x28] sm:$0xff] %vm584, %v581
      %591 = vst.msk [vmem:[%s309 + $0x30] sm:$0xff] %vm584, %v582
      %592 = vst.msk [vmem:[%s309 + $0x38] sm:$0xff] %vm584, %v583
      %p593 = scmp.lt.s32.totalorder %s21, 1
      %s594 = scalar_select %p593, %s21, 1
      %p595 = scmp.lt.s32.totalorder %s22, 0
      %s596 = scalar_select %p595, %s22, 0
      %s597 = smul.addr %s594, 8
      %s598 = sadd.s32 %s596, %s597
      %s599 = smul.addr %s598, 4
      %s600 = scalar_lea.vmem %s4, %s599
      %p601 = scmp.lt.s32.totalorder %s21, 1
      %s602 = scalar_select %p601, %s21, 1
      %p603 = scmp.lt.s32.totalorder %s22, 0
      %s604 = scalar_select %p603, %s22, 0
      %s605 = smul.addr %s604, 8
      %s606 = smul.addr %s602, 8
      %s607 = sadd.s32 %s605, %s606
      %s608 = smul.addr %s607, 8
      %s609 = scalar_lea.vmem %s5, %s608
      // Predicated region
      $region37: #{pointgencon_forward.4} parent=35 // pred_check
        %p610 = pneg %p147
      $region38: #{pointgencon_forward.4} parent=35 // pred_check_branch
        %612 = sbr.rel (%p610) target = $region40
      $region39: #{pointgencon_forward.4} parent=35 // pred_region
        _
      $region40: #{pointgencon_forward.4} parent=35 // pred_fallthru
        _
      // Predicated region
      $region41: #{pointgencon_forward.4} parent=35 // pred_check
        %p613 = pneg %p175
      $region42: #{pointgencon_forward.4} parent=35 // pred_check_branch
        %615 = sbr.rel (%p613) target = $region44
      $region43: #{pointgencon_forward.4} parent=35 // pred_region
        _
      $region44: #{pointgencon_forward.4} parent=35 // pred_fallthru
        _
    $region36: #{pointgencon_forward.4} parent=5 // pred_fallthru
      _
    %p616 = scmp.le.s32.totalorder 2, %s12
    // Predicated region
    $region45: #{pointgencon_forward.4} parent=5 // pred_check
      %p617 = pneg %p616
    $region46: #{pointgencon_forward.4} parent=5 // pred_check_branch
      %619 = sbr.rel (%p617) target = $region48
    $region47: #{pointgencon_forward.4} parent=5 // pred_region
      %s620 = ssub.s32 %s12, 2
      // Predicated region
      $region49: #{pointgencon_forward.4} parent=47 // pred_check
        %p621 = pneg %p153
      $region50: #{pointgencon_forward.4} parent=47 // pred_check_branch
        %623 = sbr.rel (%p621) target = $region52
      $region51: #{pointgencon_forward.4} parent=47 // pred_region
        %p624 = scmp.lt.s32.totalorder %s23, 1
        %s625 = scalar_select %p624, %s23, 1
        %p626 = scmp.lt.s32.totalorder %s24, 0
        %s627 = scalar_select %p626, %s24, 0
        %s628 = smul.addr %s625, 8
        %s629 = sadd.s32 %s627, %s628
        %s630 = smul.addr %s629, 4
        %s631 = scalar_lea.vmem %s4, %s630
      $region52: #{pointgencon_forward.4} parent=47 // pred_fallthru
        _
      // Predicated region
      $region53: #{pointgencon_forward.4} parent=47 // pred_check
        %p632 = pneg %p181
      $region54: #{pointgencon_forward.4} parent=47 // pred_check_branch
        %634 = sbr.rel (%p632) target = $region56
      $region55: #{pointgencon_forward.4} parent=47 // pred_region
        %p635 = scmp.lt.s32.totalorder %s23, 1
        %s636 = scalar_select %p635, %s23, 1
        %p637 = scmp.lt.s32.totalorder %s24, 0
        %s638 = scalar_select %p637, %s24, 0
        %s639 = smul.addr %s638, 8
        %s640 = smul.addr %s636, 8
        %s641 = sadd.s32 %s639, %s640
        %s642 = smul.addr %s641, 8
        %s643 = scalar_lea.vmem %s5, %s642
      $region56: #{pointgencon_forward.4} parent=47 // pred_fallthru
        _
    $region48: #{pointgencon_forward.4} parent=5 // pred_fallthru
      _
  $region6: #{pointgencon_forward.4} parent=0 // loop_footer
    %s16 = sadd.s32 1, %s12
  $region7: #{pointgencon_forward.4} parent=0 // loop_footer_branch
    %11 = sbr.rel target = $region3
  $region8: #{pointgencon_forward.4} parent=0 // loop_exit
    _

// kernel: pointgencon_forward.5
$region0: #{pointgencon_forward.5}
  #allocation0 [shape = 'u32[]', space=smem, size = 0x4, offset = 0x4, fixed_abs, tag = 'smem constant byte address 0x4 - core index']
  #allocation1 [shape = 'u32[144,128]{1,0:T(1,128)}', space=vmem, size = 0x12000, scoped, tag = 'internal scratch']
  %s0 = inlined_call_operand.vmem [shape: bf16[2,64,16], index: 0, kind: input, shape index: {}]
  %s1 = inlined_call_operand.vmem [shape: f32[64,1], index: 1, kind: input, shape index: {}]
  %s2 = inlined_call_operand.vmem [shape: f32[64,1], index: 2, kind: input, shape index: {}]
  %s3 = inlined_call_operand.vmem [shape: bf16[32,64], index: 3, kind: input, shape index: {}]
  %s4 = inlined_call_operand.vmem [shape: f32[32,1], index: 4, kind: input, shape index: {}]
  %s5 = inlined_call_operand.vmem [shape: bf16[2,32,16], index: 5, kind: output, shape index: {0}]
  %s6 = inlined_call_operand.vmem [shape: f32[2,1,32,2], index: 6, kind: output, shape index: {1}]
  %7 = xla_tuple %s5, %s6
  %s8 = sld [smem:[#allocation0]]
  $region61: #{pointgencon_forward.5} parent=0
    _
  %s10 = ssub.s32 1, %s8
  %s11 = scalar_select 0, %s10, %s8
  loop: start=0, step=1, limit=4
  $region2: #{pointgencon_forward.5} parent=0 // loop_pre_header
    _
  $region3: #{pointgencon_forward.5} parent=0 // loop_header
    %s13 = sphi 0, %s17
    %p14 = scmp.ge.s32.totalorder %s13, 4
    %s20 = sphi 0, %s32
    %s21 = sphi 0, %s28
    %s22 = sphi 0, %s20
    %s23 = sphi 0, %s21
    %s24 = sphi 0, %s22
    %s25 = sphi 0, %s23
    %s37 = sphi 0, %s39
    %s40 = sphi 0, %s37
    %s41 = sphi 0, %s40
    %s57 = sphi 0, %s41
    %s61 = sphi 0, %s61
    %s63 = sphi 0, %s61
    %s64 = sphi 0, %s63
    %s78 = sphi 0, %s64
    %s82 = sphi 0, %s82
    %s84 = sphi 0, %s82
    %s85 = sphi 0, %s84
    %s99 = sphi 0, %s85
    %s103 = sphi 0, %s103
    %s105 = sphi 0, %s103
    %s106 = sphi 0, %s105
    %s120 = sphi 0, %s106
    %s124 = sphi 0, %s124
    %s126 = sphi 0, %s124
    %s127 = sphi 0, %s126
    %s141 = sphi 0, %s127
    %s149 = sphi 0, %s151
    %s152 = sphi 0, %s149
    %s153 = sphi 0, %s152
    %s169 = sphi 0, %s153
    %s177 = sphi 0, %s179
    %s180 = sphi 0, %s177
    %s181 = sphi 0, %s180
    %s197 = sphi 0, %s181
  $region4: #{pointgencon_forward.5} parent=0 // loop_header_branch
    %16 = sbr.rel (%p14) target = $region8
  $region5: #{pointgencon_forward.5} parent=0 // loop_body
    %s18 = ssub.s32 %s13, 1
    %s19 = ssub.s32 %s13, 2
    %s26 = sadd.s32 1, %s21
    %p27 = scmp.ge.s32.totalorder %s26, 1
    %s28 = scalar_select %p27, 0, %s26
    %s29 = sadd.s32 1, %s20
    %s30 = scalar_select %p27, %s29, %s20
    %p31 = scmp.ge.s32.totalorder %s30, 2
    %s32 = scalar_select %p31, 0, %s30
    %s33 = ssub.s32 %s20, %s32
    %s34 = ssub.s32 %s21, %s28
    %s35 = sor.u32 %s33, %s34
    %p36 = scmp.eq.s32.totalorder %s35, 0
    %s38 = sadd.s32 %s37, 1
    %s39 = scalar_select %p36, %s37, %s38
    %p42 = pneg %p36
    %p43 = scmp.eq.s32.totalorder %s13, 1
    %p44 = por %p42, %p43
    %p45 = scmp.ne.s32.totalorder %s37, %s40
    %p46 = scmp.eq.s32.totalorder %s13, 0
    %p47 = por %p45, %p46
    %p48 = scmp.ne.s32.totalorder %s37, %s40
    %p49 = scmp.eq.s32.totalorder %s18, 1
    %p50 = por %p48, %p49
    %p51 = scmp.ne.s32.totalorder %s40, %s41
    %p52 = scmp.eq.s32.totalorder %s18, 0
    %p53 = por %p51, %p52
    %p54 = scmp.ne.s32.totalorder %s40, %s41
    %p55 = scmp.eq.s32.totalorder %s19, 1
    %p56 = por %p54, %p55
    %p58 = scmp.ne.s32.totalorder %s41, %s57
    %p59 = scmp.eq.s32.totalorder %s19, 0
    %p60 = por %p58, %p59
    %s62 = sadd.s32 %s61, 1
    %p65 = scmp.eq.s32.totalorder %s13, 1
    %p66 = scmp.ne.s32.totalorder %s61, %s63
    %p67 = scmp.eq.s32.totalorder %s13, 0
    %p68 = por %p66, %p67
    %p69 = scmp.ne.s32.totalorder %s61, %s63
    %p70 = scmp.eq.s32.totalorder %s18, 1
    %p71 = por %p69, %p70
    %p72 = scmp.ne.s32.totalorder %s63, %s64
    %p73 = scmp.eq.s32.totalorder %s18, 0
    %p74 = por %p72, %p73
    %p75 = scmp.ne.s32.totalorder %s63, %s64
    %p76 = scmp.eq.s32.totalorder %s19, 1
    %p77 = por %p75, %p76
    %p79 = scmp.ne.s32.totalorder %s64, %s78
    %p80 = scmp.eq.s32.totalorder %s19, 0
    %p81 = por %p79, %p80
    %s83 = sadd.s32 %s82, 1
    %p86 = scmp.eq.s32.totalorder %s13, 1
    %p87 = scmp.ne.s32.totalorder %s82, %s84
    %p88 = scmp.eq.s32.totalorder %s13, 0
    %p89 = por %p87, %p88
    %p90 = scmp.ne.s32.totalorder %s82, %s84
    %p91 = scmp.eq.s32.totalorder %s18, 1
    %p92 = por %p90, %p91
    %p93 = scmp.ne.s32.totalorder %s84, %s85
    %p94 = scmp.eq.s32.totalorder %s18, 0
    %p95 = por %p93, %p94
    %p96 = scmp.ne.s32.totalorder %s84, %s85
    %p97 = scmp.eq.s32.totalorder %s19, 1
    %p98 = por %p96, %p97
    %p100 = scmp.ne.s32.totalorder %s85, %s99
    %p101 = scmp.eq.s32.totalorder %s19, 0
    %p102 = por %p100, %p101
    %s104 = sadd.s32 %s103, 1
    %p107 = scmp.eq.s32.totalorder %s13, 1
    %p108 = scmp.ne.s32.totalorder %s103, %s105
    %p109 = scmp.eq.s32.totalorder %s13, 0
    %p110 = por %p108, %p109
    %p111 = scmp.ne.s32.totalorder %s103, %s105
    %p112 = scmp.eq.s32.totalorder %s18, 1
    %p113 = por %p111, %p112
    %p114 = scmp.ne.s32.totalorder %s105, %s106
    %p115 = scmp.eq.s32.totalorder %s18, 0
    %p116 = por %p114, %p115
    %p117 = scmp.ne.s32.totalorder %s105, %s106
    %p118 = scmp.eq.s32.totalorder %s19, 1
    %p119 = por %p117, %p118
    %p121 = scmp.ne.s32.totalorder %s106, %s120
    %p122 = scmp.eq.s32.totalorder %s19, 0
    %p123 = por %p121, %p122
    %s125 = sadd.s32 %s124, 1
    %p128 = scmp.eq.s32.totalorder %s13, 1
    %p129 = scmp.ne.s32.totalorder %s124, %s126
    %p130 = scmp.eq.s32.totalorder %s13, 0
    %p131 = por %p129, %p130
    %p132 = scmp.ne.s32.totalorder %s124, %s126
    %p133 = scmp.eq.s32.totalorder %s18, 1
    %p134 = por %p132, %p133
    %p135 = scmp.ne.s32.totalorder %s126, %s127
    %p136 = scmp.eq.s32.totalorder %s18, 0
    %p137 = por %p135, %p136
    %p138 = scmp.ne.s32.totalorder %s126, %s127
    %p139 = scmp.eq.s32.totalorder %s19, 1
    %p140 = por %p138, %p139
    %p142 = scmp.ne.s32.totalorder %s127, %s141
    %p143 = scmp.eq.s32.totalorder %s19, 0
    %p144 = por %p142, %p143
    %s145 = ssub.s32 %s20, %s32
    %s146 = ssub.s32 %s21, %s28
    %s147 = sor.u32 %s145, %s146
    %p148 = scmp.eq.s32.totalorder %s147, 0
    %s150 = sadd.s32 %s149, 1
    %s151 = scalar_select %p148, %s149, %s150
    %p154 = pneg %p148
    %p155 = scmp.eq.s32.totalorder %s13, 1
    %p156 = por %p154, %p155
    %p157 = scmp.ne.s32.totalorder %s149, %s152
    %p158 = scmp.eq.s32.totalorder %s13, 0
    %p159 = por %p157, %p158
    %p160 = scmp.ne.s32.totalorder %s149, %s152
    %p161 = scmp.eq.s32.totalorder %s18, 1
    %p162 = por %p160, %p161
    %p163 = scmp.ne.s32.totalorder %s152, %s153
    %p164 = scmp.eq.s32.totalorder %s18, 0
    %p165 = por %p163, %p164
    %p166 = scmp.ne.s32.totalorder %s152, %s153
    %p167 = scmp.eq.s32.totalorder %s19, 1
    %p168 = por %p166, %p167
    %p170 = scmp.ne.s32.totalorder %s153, %s169
    %p171 = scmp.eq.s32.totalorder %s19, 0
    %p172 = por %p170, %p171
    %s173 = ssub.s32 %s20, %s32
    %s174 = ssub.s32 %s21, %s28
    %s175 = sor.u32 %s173, %s174
    %p176 = scmp.eq.s32.totalorder %s175, 0
    %s178 = sadd.s32 %s177, 1
    %s179 = scalar_select %p176, %s177, %s178
    %p182 = pneg %p176
    %p183 = scmp.eq.s32.totalorder %s13, 1
    %p184 = por %p182, %p183
    %p185 = scmp.ne.s32.totalorder %s177, %s180
    %p186 = scmp.eq.s32.totalorder %s13, 0
    %p187 = por %p185, %p186
    %p188 = scmp.ne.s32.totalorder %s177, %s180
    %p189 = scmp.eq.s32.totalorder %s18, 1
    %p190 = por %p188, %p189
    %p191 = scmp.ne.s32.totalorder %s180, %s181
    %p192 = scmp.eq.s32.totalorder %s18, 0
    %p193 = por %p191, %p192
    %p194 = scmp.ne.s32.totalorder %s180, %s181
    %p195 = scmp.eq.s32.totalorder %s19, 1
    %p196 = por %p194, %p195
    %p198 = scmp.ne.s32.totalorder %s181, %s197
    %p199 = scmp.eq.s32.totalorder %s19, 0
    %p200 = por %p198, %p199
    %p201 = scmp.le.s32.totalorder 1, %s13
    %p202 = scmp.lt.s32.totalorder %s13, 3
    %p203 = pnand %p201, %p202
    %p204 = pneg %p203
    // Predicated region
    $region9: #{pointgencon_forward.5} parent=5 // pred_check
      _
    $region10: #{pointgencon_forward.5} parent=5 // pred_check_branch
      %206 = sbr.rel (%p203) target = $region12
    $region11: #{pointgencon_forward.5} parent=5 // pred_region
      %s207 = ssub.s32 %s13, 1
      // Predicated region
      $region13: #{pointgencon_forward.5} parent=11 // pred_check
        %p208 = pneg %p74
      $region14: #{pointgencon_forward.5} parent=11 // pred_check_branch
        %210 = sbr.rel (%p208) target = $region16
      $region15: #{pointgencon_forward.5} parent=11 // pred_region
        _
      $region16: #{pointgencon_forward.5} parent=11 // pred_fallthru
        _
      // Predicated region
      $region17: #{pointgencon_forward.5} parent=11 // pred_check
        %p211 = pneg %p95
      $region18: #{pointgencon_forward.5} parent=11 // pred_check_branch
        %213 = sbr.rel (%p211) target = $region20
      $region19: #{pointgencon_forward.5} parent=11 // pred_region
        _
      $region20: #{pointgencon_forward.5} parent=11 // pred_fallthru
        _
      // Predicated region
      $region21: #{pointgencon_forward.5} parent=11 // pred_check
        %p214 = pneg %p116
      $region22: #{pointgencon_forward.5} parent=11 // pred_check_branch
        %216 = sbr.rel (%p214) target = $region24
      $region23: #{pointgencon_forward.5} parent=11 // pred_region
        _
      $region24: #{pointgencon_forward.5} parent=11 // pred_fallthru
        _
      // Predicated region
      $region25: #{pointgencon_forward.5} parent=11 // pred_check
        %p217 = pneg %p137
      $region26: #{pointgencon_forward.5} parent=11 // pred_check_branch
        %219 = sbr.rel (%p217) target = $region28
      $region27: #{pointgencon_forward.5} parent=11 // pred_region
        _
      $region28: #{pointgencon_forward.5} parent=11 // pred_fallthru
        _
    $region12: #{pointgencon_forward.5} parent=5 // pred_fallthru
      _
    %p220 = scmp.lt.s32.totalorder %s13, 2
    // Predicated region
    $region29: #{pointgencon_forward.5} parent=5 // pred_check
      %p221 = pneg %p220
    $region30: #{pointgencon_forward.5} parent=5 // pred_check_branch
      %223 = sbr.rel (%p221) target = $region32
    $region31: #{pointgencon_forward.5} parent=5 // pred_region
      // Predicated region
      $region33: #{pointgencon_forward.5} parent=31 // pred_check
        %p224 = pneg %p47
      $region34: #{pointgencon_forward.5} parent=31 // pred_check_branch
        %226 = sbr.rel (%p224) target = $region36
      $region35: #{pointgencon_forward.5} parent=31 // pred_region
        %p227 = scmp.lt.s32.totalorder %s20, 1
        %s228 = scalar_select %p227, %s20, 1
        %p229 = scmp.lt.s32.totalorder %s21, 0
        %s230 = scalar_select %p229, %s21, 0
        %s231 = smul.addr %s228, 8
        %s232 = sadd.s32 %s230, %s231
        %s233 = smul.addr %s232, 4
        %s234 = scalar_lea.vmem %s0, %s233
      $region36: #{pointgencon_forward.5} parent=31 // pred_fallthru
        _
    $region32: #{pointgencon_forward.5} parent=5 // pred_fallthru
      _
    %p235 = scmp.le.s32.totalorder 1, %s13
    %p236 = scmp.lt.s32.totalorder %s13, 3
    %p237 = pnand %p235, %p236
    %p238 = pneg %p237
    // Predicated region
    $region37: #{pointgencon_forward.5} parent=5 // pred_check
      _
    $region38: #{pointgencon_forward.5} parent=5 // pred_check_branch
      %240 = sbr.rel (%p237) target = $region40
    $region39: #{pointgencon_forward.5} parent=5 // pred_region
      %s241 = ssub.s32 %s13, 1
      %p242 = scmp.lt.s32.totalorder %s22, 1
      %s243 = scalar_select %p242, %s22, 1
      %p244 = scmp.lt.s32.totalorder %s23, 0
      %s245 = scalar_select %p244, %s23, 0
      %s246 = smul.addr %s243, 8
      %s247 = sadd.s32 %s245, %s246
      %s248 = smul.addr %s247, 4
      %s249 = scalar_lea.vmem %s0, %s248
      %p250 = pneg %p53
      %p251 = pneg %p50
      %p252 = pneg %p74
      %p253 = pneg %p71
      %p254 = pneg %p95
      %p255 = pneg %p92
      %p256 = pneg %p116
      %p257 = pneg %p113
      %p258 = pneg %p137
      %p259 = pneg %p134
      %p260 = pneg %p165
      %p261 = pneg %p162
      %p262 = scmp.lt.s32.totalorder %s22, 1
      %s263 = scalar_select %p262, %s22, 1
      %p264 = scmp.lt.s32.totalorder %s23, 0
      %s265 = scalar_select %p264, %s23, 0
      %s266 = smul.addr %s263, 4
      %s267 = sadd.s32 %s265, %s266
      %s268 = smul.addr %s267, 4
      %s269 = scalar_lea.vmem %s5, %s268
      %p270 = pneg %p193
      %p271 = pneg %p190
      %p272 = scmp.lt.s32.totalorder %s22, 1
      %s273 = scalar_select %p272, %s22, 1
      %p274 = scmp.lt.s32.totalorder %s23, 0
      %s275 = scalar_select %p274, %s23, 0
      %s276 = smul.addr %s275, 4
      %s277 = smul.addr %s273, 4
      %s278 = sadd.s32 %s276, %s277
      %s279 = smul.addr %s278, 8
      %s280 = scalar_lea.vmem %s6, %s279
      %p281 = scmp.lt.s32.totalorder %s22, 1
      %s282 = scalar_select %p281, %s22, 1
      %p283 = scmp.lt.s32.totalorder %s23, 0
      %s284 = scalar_select %p283, %s23, 0
      %s285 = smul.addr %s282, 8
      %s286 = sadd.s32 %s284, %s285
      %s287 = smul.addr %s286, 4
      %s288 = scalar_lea.vmem %s0, %s287
      %p289 = scmp.lt.s32.totalorder %s22, 1
      %s290 = scalar_select %p289, %s22, 1
      %p291 = scmp.lt.s32.totalorder %s23, 0
      %s292 = scalar_select %p291, %s23, 0
      %s293 = smul.addr %s290, 4
      %s294 = sadd.s32 %s292, %s293
      %s295 = smul.addr %s294, 4
      %s296 = scalar_lea.vmem %s5, %s295
      %p297 = scmp.lt.s32.totalorder %s22, 1
      %s298 = scalar_select %p297, %s22, 1
      %p299 = scmp.lt.s32.totalorder %s23, 0
      %s300 = scalar_select %p299, %s23, 0
      %s301 = smul.addr %s300, 4
      %s302 = smul.addr %s298, 4
      %s303 = sadd.s32 %s301, %s302
      %s304 = smul.addr %s303, 8
      %s305 = scalar_lea.vmem %s6, %s304
      %v307 = vld [vmem:[%s288] sm:$0xf]
      %v308 = vld [vmem:[%s288 + $0x4] sm:$0xf]
      %v309 = vld [vmem:[%s288 + $0x8] sm:$0xf]
      %v310 = vld [vmem:[%s288 + $0xc] sm:$0xf]
      %v311 = vld [vmem:[%s288 + $0x10] sm:$0xf]
      %v312 = vld [vmem:[%s288 + $0x14] sm:$0xf]
      %v313 = vld [vmem:[%s288 + $0x18] sm:$0xf]
      %v314 = vld [vmem:[%s288 + $0x1c] sm:$0xf]
      %v315 = vunpack.c.l.bf16 %v307
      %v316 = vunpack.c.l.bf16 %v308
      %v317 = vunpack.c.l.bf16 %v309
      %v318 = vunpack.c.l.bf16 %v310
      %v319 = vunpack.c.l.bf16 %v311
      %v320 = vunpack.c.l.bf16 %v312
      %v321 = vunpack.c.l.bf16 %v313
      %v322 = vunpack.c.l.bf16 %v314
      %v323 = vld [vmem:[%s1] sm:$0xff]
      %v324 = vld [vmem:[%s1 + $0x8] sm:$0xff]
      %v325 = vld [vmem:[%s1 + $0x10] sm:$0xff]
      %v326 = vld [vmem:[%s1 + $0x18] sm:$0xff]
      %v327 = vld [vmem:[%s1 + $0x20] sm:$0xff]
      %v328 = vld [vmem:[%s1 + $0x28] sm:$0xff]
      %v329 = vld [vmem:[%s1 + $0x30] sm:$0xff]
      %v330 = vld [vmem:[%s1 + $0x38] sm:$0xff]
      %332 = vset.pattern.permute.xlu0 0
      %333 = vperm.xlu0 %332, %v323
      %v334 = vpop.permute.xlu0 %333
      %337 = vset.pattern.permute.xlu0 0
      %338 = vperm.xlu0 %337, %v324
      %v339 = vpop.permute.xlu0 %338
      %342 = vset.pattern.permute.xlu0 0
      %343 = vperm.xlu0 %342, %v325
      %v344 = vpop.permute.xlu0 %343
      %347 = vset.pattern.permute.xlu0 0
      %348 = vperm.xlu0 %347, %v326
      %v349 = vpop.permute.xlu0 %348
      %352 = vset.pattern.permute.xlu0 0
      %353 = vperm.xlu0 %352, %v327
      %v354 = vpop.permute.xlu0 %353
      %357 = vset.pattern.permute.xlu0 0
      %358 = vperm.xlu0 %357, %v328
      %v359 = vpop.permute.xlu0 %358
      %362 = vset.pattern.permute.xlu0 0
      %363 = vperm.xlu0 %362, %v329
      %v364 = vpop.permute.xlu0 %363
      %367 = vset.pattern.permute.xlu0 0
      %368 = vperm.xlu0 %367, %v330
      %v369 = vpop.permute.xlu0 %368
      %v371 = vmul.f32 %v315, %v334
      %v372 = vmul.f32 %v316, %v339
      %v373 = vmul.f32 %v317, %v344
      %v374 = vmul.f32 %v318, %v349
      %v375 = vmul.f32 %v319, %v354
      %v376 = vmul.f32 %v320, %v359
      %v377 = vmul.f32 %v321, %v364
      %v378 = vmul.f32 %v322, %v369
      %v379 = vld [vmem:[%s2] sm:$0xff]
      %v380 = vld [vmem:[%s2 + $0x8] sm:$0xff]
      %v381 = vld [vmem:[%s2 + $0x10] sm:$0xff]
      %v382 = vld [vmem:[%s2 + $0x18] sm:$0xff]
      %v383 = vld [vmem:[%s2 + $0x20] sm:$0xff]
      %v384 = vld [vmem:[%s2 + $0x28] sm:$0xff]
      %v385 = vld [vmem:[%s2 + $0x30] sm:$0xff]
      %v386 = vld [vmem:[%s2 + $0x38] sm:$0xff]
      %388 = vset.pattern.permute.xlu0 0
      %389 = vperm.xlu0 %388, %v379
      %v390 = vpop.permute.xlu0 %389
      %393 = vset.pattern.permute.xlu0 0
      %394 = vperm.xlu0 %393, %v380
      %v395 = vpop.permute.xlu0 %394
      %398 = vset.pattern.permute.xlu0 0
      %399 = vperm.xlu0 %398, %v381
      %v400 = vpop.permute.xlu0 %399
      %403 = vset.pattern.permute.xlu0 0
      %404 = vperm.xlu0 %403, %v382
      %v405 = vpop.permute.xlu0 %404
      %408 = vset.pattern.permute.xlu0 0
      %409 = vperm.xlu0 %408, %v383
      %v410 = vpop.permute.xlu0 %409
      %413 = vset.pattern.permute.xlu0 0
      %414 = vperm.xlu0 %413, %v384
      %v415 = vpop.permute.xlu0 %414
      %418 = vset.pattern.permute.xlu0 0
      %419 = vperm.xlu0 %418, %v385
      %v420 = vpop.permute.xlu0 %419
      %423 = vset.pattern.permute.xlu0 0
      %424 = vperm.xlu0 %423, %v386
      %v425 = vpop.permute.xlu0 %424
      %v427 = vadd.f32 %v371, %v390
      %v428 = vadd.f32 %v372, %v395
      %v429 = vadd.f32 %v373, %v400
      %v430 = vadd.f32 %v374, %v405
      %v431 = vadd.f32 %v375, %v410
      %v432 = vadd.f32 %v376, %v415
      %v433 = vadd.f32 %v377, %v420
      %v434 = vadd.f32 %v378, %v425
      %v435 = vmax.f32 %v427, 0.0
      %v436 = vmax.f32 %v428, 0.0
      %v437 = vmax.f32 %v429, 0.0
      %v438 = vmax.f32 %v430, 0.0
      %v439 = vmax.f32 %v431, 0.0
      %v440 = vmax.f32 %v432, 0.0
      %v441 = vmax.f32 %v433, 0.0
      %v442 = vmax.f32 %v434, 0.0
      %v443 = vpack.c.bf16 %v436, %v435
      %v444 = vpack.c.bf16 %v438, %v437
      %v445 = vpack.c.bf16 %v440, %v439
      %v446 = vpack.c.bf16 %v442, %v441
      %v447 = vld [vmem:[%s3] sm:$0xf]
      %v448 = vld [vmem:[%s3 + $0x4] sm:$0xf]
      %v449 = vld [vmem:[%s3 + $0x8] sm:$0xf]
      %v450 = vld [vmem:[%s3 + $0xc] sm:$0xf]
      %v451 = vld [vmem:[%s4] sm:$0xff]
      %v452 = vld [vmem:[%s4 + $0x8] sm:$0xff]
      %v453 = vld [vmem:[%s4 + $0x10] sm:$0xff]
      %v454 = vld [vmem:[%s4 + $0x18] sm:$0xff]
      %456 = vset.pattern.permute.xlu0 0
      %457 = vperm.xlu0 %456, %v451
      %v458 = vpop.permute.xlu0 %457
      %461 = vset.pattern.permute.xlu0 0
      %462 = vperm.xlu0 %461, %v452
      %v463 = vpop.permute.xlu0 %462
      %466 = vset.pattern.permute.xlu0 0
      %467 = vperm.xlu0 %466, %v453
      %v468 = vpop.permute.xlu0 %467
      %471 = vset.pattern.permute.xlu0 0
      %472 = vperm.xlu0 %471, %v454
      %v473 = vpop.permute.xlu0 %472
      %v479 = vunpack.c.l.b16 %v447
      %v480 = vunpack.c.l.b16 %v448
      %v481 = vunpack.c.l.b16 %v449
      %v482 = vunpack.c.l.b16 %v450
      %v483 = vpack.c.b16 %v480, %v479
      %v484 = vpack.c.b16 %v482, %v481
      %vm485 = vcmask 523264
      %v487 = vsel %vm485, %v483, 0
      %v490 = vsel %vm485, %v484, 0
      %492 = vmatprep.subr.bf16.mxu0 0
      %493 = vmatpush1.bf16.msra.mxu0 %v443
      %494 = vmatprep.subr.bf16.mxu0 0
      %495 = vmatpush1.bf16.msra.mxu0 %v444
      %496 = vmatprep.subr.bf16.mxu0 0
      %497 = vmatpush1.bf16.msra.mxu0 %v445
      %498 = vmatprep.subr.bf16.mxu0 0
      %499 = vmatpush1.bf16.msra.mxu0 %v446
      %500 = vmatprep.subr.bf16.mxu0 0
      %501 = vmatpush1.bf16.msra.mxu0 0
      %502 = vmatprep.subr.bf16.mxu0 0
      %503 = vmatpush1.bf16.msra.mxu0 0
      %504 = vmatprep.subr.bf16.mxu0 0
      %505 = vmatpush1.bf16.msra.mxu0 0
      %506 = vmatprep.subr.bf16.mxu0 0
      %507 = vmatpush1.bf16.msra.mxu0 0
      %508 = vmatprep.subr.bf16.mxu0 0
      %509 = vmatpush1.bf16.msra.mxu0 0
      %510 = vmatprep.subr.bf16.mxu0 0
      %511 = vmatpush1.bf16.msra.mxu0 0
      %512 = vmatprep.subr.bf16.mxu0 0
      %513 = vmatpush1.bf16.msra.mxu0 0
      %514 = vmatprep.subr.bf16.mxu0 0
      %515 = vmatpush1.bf16.msra.mxu0 0
      %516 = vmatprep.subr.bf16.mxu0 0
      %517 = vmatpush1.bf16.msra.mxu0 0
      %518 = vmatprep.subr.bf16.mxu0 0
      %519 = vmatpush1.bf16.msra.mxu0 0
      %520 = vmatprep.subr.bf16.mxu0 0
      %521 = vmatpush1.bf16.msra.mxu0 0
      %522 = vmatprep.subr.bf16.mxu0 0
      %523 = vmatpush1.bf16.msra.mxu0 0
      %524 = vmatprep.mubr.bf16.mxu0 0
      %525 = vmatmul.mubr.bf16.gmra.mrb[0].mxu0 %v487
      %v526 = vpop.f32.mrb[0].mxu0
      %v527 = vadd.f32 %v458, %v526
      %v528 = vpop.f32.mrb[0].mxu0
      %v529 = vpop.f32.mrb[0].mxu0
      %v530 = vadd.f32 %v463, %v529
      %v531 = vpop.f32.mrb[0].mxu0
      %532 = vmatprep.mubr.bf16.mxu0 0
      %533 = vmatmul.mubr.bf16.gmra.mrb[0].mxu0 %v490
      %v534 = vpop.f32.mrb[0].mxu0
      %v535 = vadd.f32 %v468, %v534
      %v536 = vpop.f32.mrb[0].mxu0
      %v537 = vpop.f32.mrb[0].mxu0
      %v538 = vadd.f32 %v473, %v537
      %v539 = vpop.f32.mrb[0].mxu0
      %540 = vdwg.mxu0
      %v541 = vpack.c.bf16 %v530, %v527
      %v542 = vpack.c.bf16 %v538, %v535
      %v545 = vunpack.c.l.b16 %v541
      %v546 = vunpack.c.h.b16 %v541
      %v547 = vunpack.c.l.b16 %v542
      %v548 = vunpack.c.h.b16 %v542
      %v549 = vpack.c.b16 %v545, %v545
      %v550 = vpack.c.b16 %v546, %v546
      %v551 = vpack.c.b16 %v547, %v547
      %v552 = vpack.c.b16 %v548, %v548
      %vm557 = vcmask 125952
      %558 = vst.msk [vmem:[%s296] sm:$0xf] %vm557, %v549
      %559 = vst.msk [vmem:[%s296 + $0x4] sm:$0xf] %vm557, %v550
      %560 = vst.msk [vmem:[%s296 + $0x8] sm:$0xf] %vm557, %v551
      %561 = vst.msk [vmem:[%s296 + $0xc] sm:$0xf] %vm557, %v552
      %vm562 = vcmask 130048
      %v563 = vsel %vm562, %v527, 0.0
      %564 = vadd.xlane.f32.xlu0 %v563
      %v565 = vpop.xlane.xlu0 %564
      %v566 = vsel %vm562, %v530, 0.0
      %567 = vadd.xlane.f32.xlu0 %v566
      %v568 = vpop.xlane.xlu0 %567
      %v569 = vsel %vm562, %v535, 0.0
      %570 = vadd.xlane.f32.xlu0 %v569
      %v571 = vpop.xlane.xlu0 %570
      %v572 = vsel %vm562, %v538, 0.0
      %573 = vadd.xlane.f32.xlu0 %v572
      %v574 = vpop.xlane.xlu0 %573
      %v575 = vmul.f32 %v527, %v527
      %v576 = vmul.f32 %v530, %v530
      %v577 = vmul.f32 %v535, %v535
      %v578 = vmul.f32 %v538, %v538
      %v579 = vsel %vm562, %v575, 0.0
      %580 = vadd.xlane.f32.xlu0 %v579
      %v581 = vpop.xlane.xlu0 %580
      %v582 = vsel %vm562, %v576, 0.0
      %583 = vadd.xlane.f32.xlu0 %v582
      %v584 = vpop.xlane.xlu0 %583
      %v585 = vsel %vm562, %v577, 0.0
      %586 = vadd.xlane.f32.xlu0 %v585
      %v587 = vpop.xlane.xlu0 %586
      %v588 = vsel %vm562, %v578, 0.0
      %589 = vadd.xlane.f32.xlu0 %v588
      %v590 = vpop.xlane.xlu0 %589
      %vm591 = vcmask 7168
      %v592 = vsel %vm591, %v565, %v581
      %v593 = vsel %vm591, %v568, %v584
      %v594 = vsel %vm591, %v571, %v587
      %v595 = vsel %vm591, %v574, %v590
      %vm596 = vcmask 15360
      %597 = vst.msk [vmem:[%s305] sm:$0xff] %vm596, %v592
      %598 = vst.msk [vmem:[%s305 + $0x8] sm:$0xff] %vm596, %v593
      %599 = vst.msk [vmem:[%s305 + $0x10] sm:$0xff] %vm596, %v594
      %600 = vst.msk [vmem:[%s305 + $0x18] sm:$0xff] %vm596, %v595
      %p601 = scmp.lt.s32.totalorder %s22, 1
      %s602 = scalar_select %p601, %s22, 1
      %p603 = scmp.lt.s32.totalorder %s23, 0
      %s604 = scalar_select %p603, %s23, 0
      %s605 = smul.addr %s602, 4
      %s606 = sadd.s32 %s604, %s605
      %s607 = smul.addr %s606, 4
      %s608 = scalar_lea.vmem %s5, %s607
      %p609 = scmp.lt.s32.totalorder %s22, 1
      %s610 = scalar_select %p609, %s22, 1
      %p611 = scmp.lt.s32.totalorder %s23, 0
      %s612 = scalar_select %p611, %s23, 0
      %s613 = smul.addr %s612, 4
      %s614 = smul.addr %s610, 4
      %s615 = sadd.s32 %s613, %s614
      %s616 = smul.addr %s615, 8
      %s617 = scalar_lea.vmem %s6, %s616
      // Predicated region
      $region41: #{pointgencon_forward.5} parent=39 // pred_check
        %p618 = pneg %p162
      $region42: #{pointgencon_forward.5} parent=39 // pred_check_branch
        %620 = sbr.rel (%p618) target = $region44
      $region43: #{pointgencon_forward.5} parent=39 // pred_region
        _
      $region44: #{pointgencon_forward.5} parent=39 // pred_fallthru
        _
      // Predicated region
      $region45: #{pointgencon_forward.5} parent=39 // pred_check
        %p621 = pneg %p190
      $region46: #{pointgencon_forward.5} parent=39 // pred_check_branch
        %623 = sbr.rel (%p621) target = $region48
      $region47: #{pointgencon_forward.5} parent=39 // pred_region
        _
      $region48: #{pointgencon_forward.5} parent=39 // pred_fallthru
        _
    $region40: #{pointgencon_forward.5} parent=5 // pred_fallthru
      _
    %p624 = scmp.le.s32.totalorder 2, %s13
    // Predicated region
    $region49: #{pointgencon_forward.5} parent=5 // pred_check
      %p625 = pneg %p624
    $region50: #{pointgencon_forward.5} parent=5 // pred_check_branch
      %627 = sbr.rel (%p625) target = $region52
    $region51: #{pointgencon_forward.5} parent=5 // pred_region
      %s628 = ssub.s32 %s13, 2
      // Predicated region
      $region53: #{pointgencon_forward.5} parent=51 // pred_check
        %p629 = pneg %p168
      $region54: #{pointgencon_forward.5} parent=51 // pred_check_branch
        %631 = sbr.rel (%p629) target = $region56
      $region55: #{pointgencon_forward.5} parent=51 // pred_region
        %p632 = scmp.lt.s32.totalorder %s24, 1
        %s633 = scalar_select %p632, %s24, 1
        %p634 = scmp.lt.s32.totalorder %s25, 0
        %s635 = scalar_select %p634, %s25, 0
        %s636 = smul.addr %s633, 4
        %s637 = sadd.s32 %s635, %s636
        %s638 = smul.addr %s637, 4
        %s639 = scalar_lea.vmem %s5, %s638
      $region56: #{pointgencon_forward.5} parent=51 // pred_fallthru
        _
      // Predicated region
      $region57: #{pointgencon_forward.5} parent=51 // pred_check
        %p640 = pneg %p196
      $region58: #{pointgencon_forward.5} parent=51 // pred_check_branch
        %642 = sbr.rel (%p640) target = $region60
      $region59: #{pointgencon_forward.5} parent=51 // pred_region
        %p643 = scmp.lt.s32.totalorder %s24, 1
        %s644 = scalar_select %p643, %s24, 1
        %p645 = scmp.lt.s32.totalorder %s25, 0
        %s646 = scalar_select %p645, %s25, 0
        %s647 = smul.addr %s646, 4
        %s648 = smul.addr %s644, 4
        %s649 = sadd.s32 %s647, %s648
        %s650 = smul.addr %s649, 8
        %s651 = scalar_lea.vmem %s6, %s650
      $region60: #{pointgencon_forward.5} parent=51 // pred_fallthru
        _
    $region52: #{pointgencon_forward.5} parent=5 // pred_fallthru
      _
  $region6: #{pointgencon_forward.5} parent=0 // loop_footer
    %s17 = sadd.s32 1, %s13
  $region7: #{pointgencon_forward.5} parent=0 // loop_footer_branch
    %12 = sbr.rel target = $region3
  $region8: #{pointgencon_forward.5} parent=0 // loop_exit
    _

// kernel: pointgencon_forward.6
$region0: #{pointgencon_forward.6}
  #allocation0 [shape = 'u32[]', space=smem, size = 0x4, offset = 0x4, fixed_abs, tag = 'smem constant byte address 0x4 - core index']
  #allocation1 [shape = 'u32[144,128]{1,0:T(1,128)}', space=vmem, size = 0x12000, scoped, tag = 'internal scratch']
  %s0 = inlined_call_operand.vmem [shape: bf16[2,32,16], index: 0, kind: input, shape index: {}]
  %s1 = inlined_call_operand.vmem [shape: f32[32,1], index: 1, kind: input, shape index: {}]
  %s2 = inlined_call_operand.vmem [shape: f32[32,1], index: 2, kind: input, shape index: {}]
  %s3 = inlined_call_operand.vmem [shape: bf16[16,32], index: 3, kind: input, shape index: {}]
  %s4 = inlined_call_operand.vmem [shape: f32[16,1], index: 4, kind: input, shape index: {}]
  %s5 = inlined_call_operand.vmem [shape: bf16[2,16,16], index: 5, kind: output, shape index: {0}]
  %s6 = inlined_call_operand.vmem [shape: f32[2,1,16,2], index: 6, kind: output, shape index: {1}]
  %7 = xla_tuple %s5, %s6
  %s8 = sld [smem:[#allocation0]]
  $region61: #{pointgencon_forward.6} parent=0
    _
  %s10 = ssub.s32 1, %s8
  %s11 = scalar_select 0, %s10, %s8
  loop: start=0, step=1, limit=4
  $region2: #{pointgencon_forward.6} parent=0 // loop_pre_header
    _
  $region3: #{pointgencon_forward.6} parent=0 // loop_header
    %s13 = sphi 0, %s17
    %p14 = scmp.ge.s32.totalorder %s13, 4
    %s20 = sphi 0, %s32
    %s21 = sphi 0, %s28
    %s22 = sphi 0, %s20
    %s23 = sphi 0, %s21
    %s24 = sphi 0, %s22
    %s25 = sphi 0, %s23
    %s37 = sphi 0, %s39
    %s40 = sphi 0, %s37
    %s41 = sphi 0, %s40
    %s57 = sphi 0, %s41
    %s61 = sphi 0, %s61
    %s63 = sphi 0, %s61
    %s64 = sphi 0, %s63
    %s78 = sphi 0, %s64
    %s82 = sphi 0, %s82
    %s84 = sphi 0, %s82
    %s85 = sphi 0, %s84
    %s99 = sphi 0, %s85
    %s103 = sphi 0, %s103
    %s105 = sphi 0, %s103
    %s106 = sphi 0, %s105
    %s120 = sphi 0, %s106
    %s124 = sphi 0, %s124
    %s126 = sphi 0, %s124
    %s127 = sphi 0, %s126
    %s141 = sphi 0, %s127
    %s149 = sphi 0, %s151
    %s152 = sphi 0, %s149
    %s153 = sphi 0, %s152
    %s169 = sphi 0, %s153
    %s177 = sphi 0, %s179
    %s180 = sphi 0, %s177
    %s181 = sphi 0, %s180
    %s197 = sphi 0, %s181
  $region4: #{pointgencon_forward.6} parent=0 // loop_header_branch
    %16 = sbr.rel (%p14) target = $region8
  $region5: #{pointgencon_forward.6} parent=0 // loop_body
    %s18 = ssub.s32 %s13, 1
    %s19 = ssub.s32 %s13, 2
    %s26 = sadd.s32 1, %s21
    %p27 = scmp.ge.s32.totalorder %s26, 1
    %s28 = scalar_select %p27, 0, %s26
    %s29 = sadd.s32 1, %s20
    %s30 = scalar_select %p27, %s29, %s20
    %p31 = scmp.ge.s32.totalorder %s30, 2
    %s32 = scalar_select %p31, 0, %s30
    %s33 = ssub.s32 %s20, %s32
    %s34 = ssub.s32 %s21, %s28
    %s35 = sor.u32 %s33, %s34
    %p36 = scmp.eq.s32.totalorder %s35, 0
    %s38 = sadd.s32 %s37, 1
    %s39 = scalar_select %p36, %s37, %s38
    %p42 = pneg %p36
    %p43 = scmp.eq.s32.totalorder %s13, 1
    %p44 = por %p42, %p43
    %p45 = scmp.ne.s32.totalorder %s37, %s40
    %p46 = scmp.eq.s32.totalorder %s13, 0
    %p47 = por %p45, %p46
    %p48 = scmp.ne.s32.totalorder %s37, %s40
    %p49 = scmp.eq.s32.totalorder %s18, 1
    %p50 = por %p48, %p49
    %p51 = scmp.ne.s32.totalorder %s40, %s41
    %p52 = scmp.eq.s32.totalorder %s18, 0
    %p53 = por %p51, %p52
    %p54 = scmp.ne.s32.totalorder %s40, %s41
    %p55 = scmp.eq.s32.totalorder %s19, 1
    %p56 = por %p54, %p55
    %p58 = scmp.ne.s32.totalorder %s41, %s57
    %p59 = scmp.eq.s32.totalorder %s19, 0
    %p60 = por %p58, %p59
    %s62 = sadd.s32 %s61, 1
    %p65 = scmp.eq.s32.totalorder %s13, 1
    %p66 = scmp.ne.s32.totalorder %s61, %s63
    %p67 = scmp.eq.s32.totalorder %s13, 0
    %p68 = por %p66, %p67
    %p69 = scmp.ne.s32.totalorder %s61, %s63
    %p70 = scmp.eq.s32.totalorder %s18, 1
    %p71 = por %p69, %p70
    %p72 = scmp.ne.s32.totalorder %s63, %s64
    %p73 = scmp.eq.s32.totalorder %s18, 0
    %p74 = por %p72, %p73
    %p75 = scmp.ne.s32.totalorder %s63, %s64
    %p76 = scmp.eq.s32.totalorder %s19, 1
    %p77 = por %p75, %p76
    %p79 = scmp.ne.s32.totalorder %s64, %s78
    %p80 = scmp.eq.s32.totalorder %s19, 0
    %p81 = por %p79, %p80
    %s83 = sadd.s32 %s82, 1
    %p86 = scmp.eq.s32.totalorder %s13, 1
    %p87 = scmp.ne.s32.totalorder %s82, %s84
    %p88 = scmp.eq.s32.totalorder %s13, 0
    %p89 = por %p87, %p88
    %p90 = scmp.ne.s32.totalorder %s82, %s84
    %p91 = scmp.eq.s32.totalorder %s18, 1
    %p92 = por %p90, %p91
    %p93 = scmp.ne.s32.totalorder %s84, %s85
    %p94 = scmp.eq.s32.totalorder %s18, 0
    %p95 = por %p93, %p94
    %p96 = scmp.ne.s32.totalorder %s84, %s85
    %p97 = scmp.eq.s32.totalorder %s19, 1
    %p98 = por %p96, %p97
    %p100 = scmp.ne.s32.totalorder %s85, %s99
    %p101 = scmp.eq.s32.totalorder %s19, 0
    %p102 = por %p100, %p101
    %s104 = sadd.s32 %s103, 1
    %p107 = scmp.eq.s32.totalorder %s13, 1
    %p108 = scmp.ne.s32.totalorder %s103, %s105
    %p109 = scmp.eq.s32.totalorder %s13, 0
    %p110 = por %p108, %p109
    %p111 = scmp.ne.s32.totalorder %s103, %s105
    %p112 = scmp.eq.s32.totalorder %s18, 1
    %p113 = por %p111, %p112
    %p114 = scmp.ne.s32.totalorder %s105, %s106
    %p115 = scmp.eq.s32.totalorder %s18, 0
    %p116 = por %p114, %p115
    %p117 = scmp.ne.s32.totalorder %s105, %s106
    %p118 = scmp.eq.s32.totalorder %s19, 1
    %p119 = por %p117, %p118
    %p121 = scmp.ne.s32.totalorder %s106, %s120
    %p122 = scmp.eq.s32.totalorder %s19, 0
    %p123 = por %p121, %p122
    %s125 = sadd.s32 %s124, 1
    %p128 = scmp.eq.s32.totalorder %s13, 1
    %p129 = scmp.ne.s32.totalorder %s124, %s126
    %p130 = scmp.eq.s32.totalorder %s13, 0
    %p131 = por %p129, %p130
    %p132 = scmp.ne.s32.totalorder %s124, %s126
    %p133 = scmp.eq.s32.totalorder %s18, 1
    %p134 = por %p132, %p133
    %p135 = scmp.ne.s32.totalorder %s126, %s127
    %p136 = scmp.eq.s32.totalorder %s18, 0
    %p137 = por %p135, %p136
    %p138 = scmp.ne.s32.totalorder %s126, %s127
    %p139 = scmp.eq.s32.totalorder %s19, 1
    %p140 = por %p138, %p139
    %p142 = scmp.ne.s32.totalorder %s127, %s141
    %p143 = scmp.eq.s32.totalorder %s19, 0
    %p144 = por %p142, %p143
    %s145 = ssub.s32 %s20, %s32
    %s146 = ssub.s32 %s21, %s28
    %s147 = sor.u32 %s145, %s146
    %p148 = scmp.eq.s32.totalorder %s147, 0
    %s150 = sadd.s32 %s149, 1
    %s151 = scalar_select %p148, %s149, %s150
    %p154 = pneg %p148
    %p155 = scmp.eq.s32.totalorder %s13, 1
    %p156 = por %p154, %p155
    %p157 = scmp.ne.s32.totalorder %s149, %s152
    %p158 = scmp.eq.s32.totalorder %s13, 0
    %p159 = por %p157, %p158
    %p160 = scmp.ne.s32.totalorder %s149, %s152
    %p161 = scmp.eq.s32.totalorder %s18, 1
    %p162 = por %p160, %p161
    %p163 = scmp.ne.s32.totalorder %s152, %s153
    %p164 = scmp.eq.s32.totalorder %s18, 0
    %p165 = por %p163, %p164
    %p166 = scmp.ne.s32.totalorder %s152, %s153
    %p167 = scmp.eq.s32.totalorder %s19, 1
    %p168 = por %p166, %p167
    %p170 = scmp.ne.s32.totalorder %s153, %s169
    %p171 = scmp.eq.s32.totalorder %s19, 0
    %p172 = por %p170, %p171
    %s173 = ssub.s32 %s20, %s32
    %s174 = ssub.s32 %s21, %s28
    %s175 = sor.u32 %s173, %s174
    %p176 = scmp.eq.s32.totalorder %s175, 0
    %s178 = sadd.s32 %s177, 1
    %s179 = scalar_select %p176, %s177, %s178
    %p182 = pneg %p176
    %p183 = scmp.eq.s32.totalorder %s13, 1
    %p184 = por %p182, %p183
    %p185 = scmp.ne.s32.totalorder %s177, %s180
    %p186 = scmp.eq.s32.totalorder %s13, 0
    %p187 = por %p185, %p186
    %p188 = scmp.ne.s32.totalorder %s177, %s180
    %p189 = scmp.eq.s32.totalorder %s18, 1
    %p190 = por %p188, %p189
    %p191 = scmp.ne.s32.totalorder %s180, %s181
    %p192 = scmp.eq.s32.totalorder %s18, 0
    %p193 = por %p191, %p192
    %p194 = scmp.ne.s32.totalorder %s180, %s181
    %p195 = scmp.eq.s32.totalorder %s19, 1
    %p196 = por %p194, %p195
    %p198 = scmp.ne.s32.totalorder %s181, %s197
    %p199 = scmp.eq.s32.totalorder %s19, 0
    %p200 = por %p198, %p199
    %p201 = scmp.le.s32.totalorder 1, %s13
    %p202 = scmp.lt.s32.totalorder %s13, 3
    %p203 = pnand %p201, %p202
    %p204 = pneg %p203
    // Predicated region
    $region9: #{pointgencon_forward.6} parent=5 // pred_check
      _
    $region10: #{pointgencon_forward.6} parent=5 // pred_check_branch
      %206 = sbr.rel (%p203) target = $region12
    $region11: #{pointgencon_forward.6} parent=5 // pred_region
      %s207 = ssub.s32 %s13, 1
      // Predicated region
      $region13: #{pointgencon_forward.6} parent=11 // pred_check
        %p208 = pneg %p74
      $region14: #{pointgencon_forward.6} parent=11 // pred_check_branch
        %210 = sbr.rel (%p208) target = $region16
      $region15: #{pointgencon_forward.6} parent=11 // pred_region
        _
      $region16: #{pointgencon_forward.6} parent=11 // pred_fallthru
        _
      // Predicated region
      $region17: #{pointgencon_forward.6} parent=11 // pred_check
        %p211 = pneg %p95
      $region18: #{pointgencon_forward.6} parent=11 // pred_check_branch
        %213 = sbr.rel (%p211) target = $region20
      $region19: #{pointgencon_forward.6} parent=11 // pred_region
        _
      $region20: #{pointgencon_forward.6} parent=11 // pred_fallthru
        _
      // Predicated region
      $region21: #{pointgencon_forward.6} parent=11 // pred_check
        %p214 = pneg %p116
      $region22: #{pointgencon_forward.6} parent=11 // pred_check_branch
        %216 = sbr.rel (%p214) target = $region24
      $region23: #{pointgencon_forward.6} parent=11 // pred_region
        _
      $region24: #{pointgencon_forward.6} parent=11 // pred_fallthru
        _
      // Predicated region
      $region25: #{pointgencon_forward.6} parent=11 // pred_check
        %p217 = pneg %p137
      $region26: #{pointgencon_forward.6} parent=11 // pred_check_branch
        %219 = sbr.rel (%p217) target = $region28
      $region27: #{pointgencon_forward.6} parent=11 // pred_region
        _
      $region28: #{pointgencon_forward.6} parent=11 // pred_fallthru
        _
    $region12: #{pointgencon_forward.6} parent=5 // pred_fallthru
      _
    %p220 = scmp.lt.s32.totalorder %s13, 2
    // Predicated region
    $region29: #{pointgencon_forward.6} parent=5 // pred_check
      %p221 = pneg %p220
    $region30: #{pointgencon_forward.6} parent=5 // pred_check_branch
      %223 = sbr.rel (%p221) target = $region32
    $region31: #{pointgencon_forward.6} parent=5 // pred_region
      // Predicated region
      $region33: #{pointgencon_forward.6} parent=31 // pred_check
        %p224 = pneg %p47
      $region34: #{pointgencon_forward.6} parent=31 // pred_check_branch
        %226 = sbr.rel (%p224) target = $region36
      $region35: #{pointgencon_forward.6} parent=31 // pred_region
        %p227 = scmp.lt.s32.totalorder %s20, 1
        %s228 = scalar_select %p227, %s20, 1
        %p229 = scmp.lt.s32.totalorder %s21, 0
        %s230 = scalar_select %p229, %s21, 0
        %s231 = smul.addr %s228, 4
        %s232 = sadd.s32 %s230, %s231
        %s233 = smul.addr %s232, 4
        %s234 = scalar_lea.vmem %s0, %s233
      $region36: #{pointgencon_forward.6} parent=31 // pred_fallthru
        _
    $region32: #{pointgencon_forward.6} parent=5 // pred_fallthru
      _
    %p235 = scmp.le.s32.totalorder 1, %s13
    %p236 = scmp.lt.s32.totalorder %s13, 3
    %p237 = pnand %p235, %p236
    %p238 = pneg %p237
    // Predicated region
    $region37: #{pointgencon_forward.6} parent=5 // pred_check
      _
    $region38: #{pointgencon_forward.6} parent=5 // pred_check_branch
      %240 = sbr.rel (%p237) target = $region40
    $region39: #{pointgencon_forward.6} parent=5 // pred_region
      %s241 = ssub.s32 %s13, 1
      %p242 = scmp.lt.s32.totalorder %s22, 1
      %s243 = scalar_select %p242, %s22, 1
      %p244 = scmp.lt.s32.totalorder %s23, 0
      %s245 = scalar_select %p244, %s23, 0
      %s246 = smul.addr %s243, 4
      %s247 = sadd.s32 %s245, %s246
      %s248 = smul.addr %s247, 4
      %s249 = scalar_lea.vmem %s0, %s248
      %p250 = pneg %p53
      %p251 = pneg %p50
      %p252 = pneg %p74
      %p253 = pneg %p71
      %p254 = pneg %p95
      %p255 = pneg %p92
      %p256 = pneg %p116
      %p257 = pneg %p113
      %p258 = pneg %p137
      %p259 = pneg %p134
      %p260 = pneg %p165
      %p261 = pneg %p162
      %p262 = scmp.lt.s32.totalorder %s22, 1
      %s263 = scalar_select %p262, %s22, 1
      %p264 = scmp.lt.s32.totalorder %s23, 0
      %s265 = scalar_select %p264, %s23, 0
      %s266 = smul.addr %s263, 2
      %s267 = sadd.s32 %s265, %s266
      %s268 = smul.addr %s267, 4
      %s269 = scalar_lea.vmem %s5, %s268
      %p270 = pneg %p193
      %p271 = pneg %p190
      %p272 = scmp.lt.s32.totalorder %s22, 1
      %s273 = scalar_select %p272, %s22, 1
      %p274 = scmp.lt.s32.totalorder %s23, 0
      %s275 = scalar_select %p274, %s23, 0
      %s276 = smul.addr %s275, 2
      %s277 = smul.addr %s273, 2
      %s278 = sadd.s32 %s276, %s277
      %s279 = smul.addr %s278, 8
      %s280 = scalar_lea.vmem %s6, %s279
      %p281 = scmp.lt.s32.totalorder %s22, 1
      %s282 = scalar_select %p281, %s22, 1
      %p283 = scmp.lt.s32.totalorder %s23, 0
      %s284 = scalar_select %p283, %s23, 0
      %s285 = smul.addr %s282, 4
      %s286 = sadd.s32 %s284, %s285
      %s287 = smul.addr %s286, 4
      %s288 = scalar_lea.vmem %s0, %s287
      %p289 = scmp.lt.s32.totalorder %s22, 1
      %s290 = scalar_select %p289, %s22, 1
      %p291 = scmp.lt.s32.totalorder %s23, 0
      %s292 = scalar_select %p291, %s23, 0
      %s293 = smul.addr %s290, 2
      %s294 = sadd.s32 %s292, %s293
      %s295 = smul.addr %s294, 4
      %s296 = scalar_lea.vmem %s5, %s295
      %p297 = scmp.lt.s32.totalorder %s22, 1
      %s298 = scalar_select %p297, %s22, 1
      %p299 = scmp.lt.s32.totalorder %s23, 0
      %s300 = scalar_select %p299, %s23, 0
      %s301 = smul.addr %s300, 2
      %s302 = smul.addr %s298, 2
      %s303 = sadd.s32 %s301, %s302
      %s304 = smul.addr %s303, 8
      %s305 = scalar_lea.vmem %s6, %s304
      %v307 = vld [vmem:[%s288] sm:$0xf]
      %v308 = vld [vmem:[%s288 + $0x4] sm:$0xf]
      %v309 = vld [vmem:[%s288 + $0x8] sm:$0xf]
      %v310 = vld [vmem:[%s288 + $0xc] sm:$0xf]
      %v311 = vunpack.c.l.bf16 %v307
      %v312 = vunpack.c.l.bf16 %v308
      %v313 = vunpack.c.l.bf16 %v309
      %v314 = vunpack.c.l.bf16 %v310
      %v315 = vld [vmem:[%s1] sm:$0xff]
      %v316 = vld [vmem:[%s1 + $0x8] sm:$0xff]
      %v317 = vld [vmem:[%s1 + $0x10] sm:$0xff]
      %v318 = vld [vmem:[%s1 + $0x18] sm:$0xff]
      %320 = vset.pattern.permute.xlu0 0
      %321 = vperm.xlu0 %320, %v315
      %v322 = vpop.permute.xlu0 %321
      %325 = vset.pattern.permute.xlu0 0
      %326 = vperm.xlu0 %325, %v316
      %v327 = vpop.permute.xlu0 %326
      %330 = vset.pattern.permute.xlu0 0
      %331 = vperm.xlu0 %330, %v317
      %v332 = vpop.permute.xlu0 %331
      %335 = vset.pattern.permute.xlu0 0
      %336 = vperm.xlu0 %335, %v318
      %v337 = vpop.permute.xlu0 %336
      %v339 = vmul.f32 %v311, %v322
      %v340 = vmul.f32 %v312, %v327
      %v341 = vmul.f32 %v313, %v332
      %v342 = vmul.f32 %v314, %v337
      %v343 = vld [vmem:[%s2] sm:$0xff]
      %v344 = vld [vmem:[%s2 + $0x8] sm:$0xff]
      %v345 = vld [vmem:[%s2 + $0x10] sm:$0xff]
      %v346 = vld [vmem:[%s2 + $0x18] sm:$0xff]
      %348 = vset.pattern.permute.xlu0 0
      %349 = vperm.xlu0 %348, %v343
      %v350 = vpop.permute.xlu0 %349
      %353 = vset.pattern.permute.xlu0 0
      %354 = vperm.xlu0 %353, %v344
      %v355 = vpop.permute.xlu0 %354
      %358 = vset.pattern.permute.xlu0 0
      %359 = vperm.xlu0 %358, %v345
      %v360 = vpop.permute.xlu0 %359
      %363 = vset.pattern.permute.xlu0 0
      %364 = vperm.xlu0 %363, %v346
      %v365 = vpop.permute.xlu0 %364
      %v367 = vadd.f32 %v339, %v350
      %v368 = vadd.f32 %v340, %v355
      %v369 = vadd.f32 %v341, %v360
      %v370 = vadd.f32 %v342, %v365
      %v371 = vmax.f32 %v367, 0.0
      %v372 = vmax.f32 %v368, 0.0
      %v373 = vmax.f32 %v369, 0.0
      %v374 = vmax.f32 %v370, 0.0
      %v375 = vpack.c.bf16 %v372, %v371
      %v376 = vpack.c.bf16 %v374, %v373
      %v377 = vld [vmem:[%s3] sm:$0xf]
      %v378 = vld [vmem:[%s3 + $0x4] sm:$0xf]
      %v379 = vld [vmem:[%s4] sm:$0xff]
      %v380 = vld [vmem:[%s4 + $0x8] sm:$0xff]
      %382 = vset.pattern.permute.xlu0 0
      %383 = vperm.xlu0 %382, %v379
      %v384 = vpop.permute.xlu0 %383
      %387 = vset.pattern.permute.xlu0 0
      %388 = vperm.xlu0 %387, %v380
      %v389 = vpop.permute.xlu0 %388
      %v393 = vunpack.c.l.b16 %v377
      %v394 = vunpack.c.l.b16 %v378
      %v395 = vpack.c.b16 %v394, %v393
      %vm396 = vcmask 261120
      %v398 = vsel %vm396, %v395, 0
      %400 = vmatprep.subr.bf16.mxu0 0
      %401 = vmatpush1.bf16.msra.mxu0 %v375
      %402 = vmatprep.subr.bf16.mxu0 0
      %403 = vmatpush1.bf16.msra.mxu0 %v376
      %404 = vmatprep.subr.bf16.mxu0 0
      %405 = vmatpush1.bf16.msra.mxu0 0
      %406 = vmatprep.subr.bf16.mxu0 0
      %407 = vmatpush1.bf16.msra.mxu0 0
      %408 = vmatprep.subr.bf16.mxu0 0
      %409 = vmatpush1.bf16.msra.mxu0 0
      %410 = vmatprep.subr.bf16.mxu0 0
      %411 = vmatpush1.bf16.msra.mxu0 0
      %412 = vmatprep.subr.bf16.mxu0 0
      %413 = vmatpush1.bf16.msra.mxu0 0
      %414 = vmatprep.subr.bf16.mxu0 0
      %415 = vmatpush1.bf16.msra.mxu0 0
      %416 = vmatprep.subr.bf16.mxu0 0
      %417 = vmatpush1.bf16.msra.mxu0 0
      %418 = vmatprep.subr.bf16.mxu0 0
      %419 = vmatpush1.bf16.msra.mxu0 0
      %420 = vmatprep.subr.bf16.mxu0 0
      %421 = vmatpush1.bf16.msra.mxu0 0
      %422 = vmatprep.subr.bf16.mxu0 0
      %423 = vmatpush1.bf16.msra.mxu0 0
      %424 = vmatprep.subr.bf16.mxu0 0
      %425 = vmatpush1.bf16.msra.mxu0 0
      %426 = vmatprep.subr.bf16.mxu0 0
      %427 = vmatpush1.bf16.msra.mxu0 0
      %428 = vmatprep.subr.bf16.mxu0 0
      %429 = vmatpush1.bf16.msra.mxu0 0
      %430 = vmatprep.subr.bf16.mxu0 0
      %431 = vmatpush1.bf16.msra.mxu0 0
      %432 = vmatprep.mubr.bf16.mxu0 0
      %433 = vmatmul.mubr.bf16.gmra.mrb[0].mxu0 %v398
      %v434 = vpop.f32.mrb[0].mxu0
      %v435 = vadd.f32 %v384, %v434
      %v436 = vpop.f32.mrb[0].mxu0
      %v437 = vpop.f32.mrb[0].mxu0
      %v438 = vadd.f32 %v389, %v437
      %v439 = vpop.f32.mrb[0].mxu0
      %440 = vdwg.mxu0
      %v441 = vpack.c.bf16 %v438, %v435
      %v443 = vunpack.c.l.b16 %v441
      %v444 = vunpack.c.h.b16 %v441
      %v445 = vpack.c.b16 %v443, %v443
      %v446 = vpack.c.b16 %v444, %v444
      %vm449 = vcmask 125952
      %450 = vst.msk [vmem:[%s296] sm:$0xf] %vm449, %v445
      %451 = vst.msk [vmem:[%s296 + $0x4] sm:$0xf] %vm449, %v446
      %vm452 = vcmask 130048
      %v453 = vsel %vm452, %v435, 0.0
      %454 = vadd.xlane.f32.xlu0 %v453
      %v455 = vpop.xlane.xlu0 %454
      %v456 = vsel %vm452, %v438, 0.0
      %457 = vadd.xlane.f32.xlu0 %v456
      %v458 = vpop.xlane.xlu0 %457
      %v459 = vmul.f32 %v435, %v435
      %v460 = vmul.f32 %v438, %v438
      %v461 = vsel %vm452, %v459, 0.0
      %462 = vadd.xlane.f32.xlu0 %v461
      %v463 = vpop.xlane.xlu0 %462
      %v464 = vsel %vm452, %v460, 0.0
      %465 = vadd.xlane.f32.xlu0 %v464
      %v466 = vpop.xlane.xlu0 %465
      %vm467 = vcmask 7168
      %v468 = vsel %vm467, %v455, %v463
      %v469 = vsel %vm467, %v458, %v466
      %vm470 = vcmask 15360
      %471 = vst.msk [vmem:[%s305] sm:$0xff] %vm470, %v468
      %472 = vst.msk [vmem:[%s305 + $0x8] sm:$0xff] %vm470, %v469
      %p473 = scmp.lt.s32.totalorder %s22, 1
      %s474 = scalar_select %p473, %s22, 1
      %p475 = scmp.lt.s32.totalorder %s23, 0
      %s476 = scalar_select %p475, %s23, 0
      %s477 = smul.addr %s474, 2
      %s478 = sadd.s32 %s476, %s477
      %s479 = smul.addr %s478, 4
      %s480 = scalar_lea.vmem %s5, %s479
      %p481 = scmp.lt.s32.totalorder %s22, 1
      %s482 = scalar_select %p481, %s22, 1
      %p483 = scmp.lt.s32.totalorder %s23, 0
      %s484 = scalar_select %p483, %s23, 0
      %s485 = smul.addr %s484, 2
      %s486 = smul.addr %s482, 2
      %s487 = sadd.s32 %s485, %s486
      %s488 = smul.addr %s487, 8
      %s489 = scalar_lea.vmem %s6, %s488
      // Predicated region
      $region41: #{pointgencon_forward.6} parent=39 // pred_check
        %p490 = pneg %p162
      $region42: #{pointgencon_forward.6} parent=39 // pred_check_branch
        %492 = sbr.rel (%p490) target = $region44
      $region43: #{pointgencon_forward.6} parent=39 // pred_region
        _
      $region44: #{pointgencon_forward.6} parent=39 // pred_fallthru
        _
      // Predicated region
      $region45: #{pointgencon_forward.6} parent=39 // pred_check
        %p493 = pneg %p190
      $region46: #{pointgencon_forward.6} parent=39 // pred_check_branch
        %495 = sbr.rel (%p493) target = $region48
      $region47: #{pointgencon_forward.6} parent=39 // pred_region
        _
      $region48: #{pointgencon_forward.6} parent=39 // pred_fallthru
        _
    $region40: #{pointgencon_forward.6} parent=5 // pred_fallthru
      _
    %p496 = scmp.le.s32.totalorder 2, %s13
    // Predicated region
    $region49: #{pointgencon_forward.6} parent=5 // pred_check
      %p497 = pneg %p496
    $region50: #{pointgencon_forward.6} parent=5 // pred_check_branch
      %499 = sbr.rel (%p497) target = $region52
    $region51: #{pointgencon_forward.6} parent=5 // pred_region
      %s500 = ssub.s32 %s13, 2
      // Predicated region
      $region53: #{pointgencon_forward.6} parent=51 // pred_check
        %p501 = pneg %p168
      $region54: #{pointgencon_forward.6} parent=51 // pred_check_branch
        %503 = sbr.rel (%p501) target = $region56
      $region55: #{pointgencon_forward.6} parent=51 // pred_region
        %p504 = scmp.lt.s32.totalorder %s24, 1
        %s505 = scalar_select %p504, %s24, 1
        %p506 = scmp.lt.s32.totalorder %s25, 0
        %s507 = scalar_select %p506, %s25, 0
        %s508 = smul.addr %s505, 2
        %s509 = sadd.s32 %s507, %s508
        %s510 = smul.addr %s509, 4
        %s511 = scalar_lea.vmem %s5, %s510
      $region56: #{pointgencon_forward.6} parent=51 // pred_fallthru
        _
      // Predicated region
      $region57: #{pointgencon_forward.6} parent=51 // pred_check
        %p512 = pneg %p196
      $region58: #{pointgencon_forward.6} parent=51 // pred_check_branch
        %514 = sbr.rel (%p512) target = $region60
      $region59: #{pointgencon_forward.6} parent=51 // pred_region
        %p515 = scmp.lt.s32.totalorder %s24, 1
        %s516 = scalar_select %p515, %s24, 1
        %p517 = scmp.lt.s32.totalorder %s25, 0
        %s518 = scalar_select %p517, %s25, 0
        %s519 = smul.addr %s518, 2
        %s520 = smul.addr %s516, 2
        %s521 = sadd.s32 %s519, %s520
        %s522 = smul.addr %s521, 8
        %s523 = scalar_lea.vmem %s6, %s522
      $region60: #{pointgencon_forward.6} parent=51 // pred_fallthru
        _
    $region52: #{pointgencon_forward.6} parent=5 // pred_fallthru
      _
  $region6: #{pointgencon_forward.6} parent=0 // loop_footer
    %s17 = sadd.s32 1, %s13
  $region7: #{pointgencon_forward.6} parent=0 // loop_footer_branch
    %12 = sbr.rel target = $region3
  $region8: #{pointgencon_forward.6} parent=0 // loop_exit
    _

// kernel: pointgencon_forward.7
$region0: #{pointgencon_forward.7}
  #allocation0 [shape = 'u32[]', space=smem, size = 0x4, offset = 0x4, fixed_abs, tag = 'smem constant byte address 0x4 - core index']
  #allocation1 [shape = 'u32[144,128]{1,0:T(1,128)}', space=vmem, size = 0x12000, scoped, tag = 'internal scratch']
  %s0 = inlined_call_operand.vmem [shape: bf16[2,16,16], index: 0, kind: input, shape index: {}]
  %s1 = inlined_call_operand.vmem [shape: f32[16,1], index: 1, kind: input, shape index: {}]
  %s2 = inlined_call_operand.vmem [shape: f32[16,1], index: 2, kind: input, shape index: {}]
  %s3 = inlined_call_operand.vmem [shape: bf16[2,16], index: 3, kind: input, shape index: {}]
  %s4 = inlined_call_operand.vmem [shape: f32[2,1], index: 4, kind: input, shape index: {}]
  %s5 = inlined_call_operand.hbm [shape: f32[2,2,16], index: 5, kind: output, shape index: {}]
  %s6 = sld [smem:[#allocation0]]
  $region53: #{pointgencon_forward.7} parent=0
    _
  %s8 = ssub.s32 1, %s6
  %s9 = scalar_select 0, %s8, %s6
  $region1: #{pointgencon_forward.7} parent=0
    #allocation2 [shape = 'u8[2048]{0}', space=vmem, size = 0x800, scoped, tag = 'output window, operand 0']
    #allocation3 [shape = 's32[2]{0}', space=sflag, size = 0x8, scoped, tag = 'scoped memory for pointgencon_forward.7']
    %10 = vsyncpa [#allocation3], 0
    %s11 = scalar_lea.sflag [#allocation3], 1
    %12 = vsyncpa %s11, 0
    loop: start=0, step=1, limit=4
    $region2: #{pointgencon_forward.7} parent=1 // loop_pre_header
      _
    $region3: #{pointgencon_forward.7} parent=1 // loop_header
      %s14 = sphi 0, %s18
      %p15 = scmp.ge.s32.totalorder %s14, 4
      %s21 = sphi 0, %s33
      %s22 = sphi 0, %s29
      %s23 = sphi 0, %s21
      %s24 = sphi 0, %s22
      %s25 = sphi 0, %s23
      %s26 = sphi 0, %s24
      %s38 = sphi 0, %s40
      %s41 = sphi 0, %s38
      %s42 = sphi 0, %s41
      %s58 = sphi 0, %s42
      %s62 = sphi 0, %s62
      %s64 = sphi 0, %s62
      %s65 = sphi 0, %s64
      %s79 = sphi 0, %s65
      %s83 = sphi 0, %s83
      %s85 = sphi 0, %s83
      %s86 = sphi 0, %s85
      %s100 = sphi 0, %s86
      %s104 = sphi 0, %s104
      %s106 = sphi 0, %s104
      %s107 = sphi 0, %s106
      %s121 = sphi 0, %s107
      %s125 = sphi 0, %s125
      %s127 = sphi 0, %s125
      %s128 = sphi 0, %s127
      %s142 = sphi 0, %s128
      %s150 = sphi 0, %s152
      %s153 = sphi 0, %s150
      %s154 = sphi 0, %s153
      %s170 = sphi 0, %s154
    $region4: #{pointgencon_forward.7} parent=1 // loop_header_branch
      %17 = sbr.rel (%p15) target = $region8
    $region5: #{pointgencon_forward.7} parent=1 // loop_body
      %s19 = ssub.s32 %s14, 1
      %s20 = ssub.s32 %s14, 2
      %s27 = sadd.s32 1, %s22
      %p28 = scmp.ge.s32.totalorder %s27, 1
      %s29 = scalar_select %p28, 0, %s27
      %s30 = sadd.s32 1, %s21
      %s31 = scalar_select %p28, %s30, %s21
      %p32 = scmp.ge.s32.totalorder %s31, 2
      %s33 = scalar_select %p32, 0, %s31
      %s34 = ssub.s32 %s21, %s33
      %s35 = ssub.s32 %s22, %s29
      %s36 = sor.u32 %s34, %s35
      %p37 = scmp.eq.s32.totalorder %s36, 0
      %s39 = sadd.s32 %s38, 1
      %s40 = scalar_select %p37, %s38, %s39
      %p43 = pneg %p37
      %p44 = scmp.eq.s32.totalorder %s14, 1
      %p45 = por %p43, %p44
      %p46 = scmp.ne.s32.totalorder %s38, %s41
      %p47 = scmp.eq.s32.totalorder %s14, 0
      %p48 = por %p46, %p47
      %p49 = scmp.ne.s32.totalorder %s38, %s41
      %p50 = scmp.eq.s32.totalorder %s19, 1
      %p51 = por %p49, %p50
      %p52 = scmp.ne.s32.totalorder %s41, %s42
      %p53 = scmp.eq.s32.totalorder %s19, 0
      %p54 = por %p52, %p53
      %p55 = scmp.ne.s32.totalorder %s41, %s42
      %p56 = scmp.eq.s32.totalorder %s20, 1
      %p57 = por %p55, %p56
      %p59 = scmp.ne.s32.totalorder %s42, %s58
      %p60 = scmp.eq.s32.totalorder %s20, 0
      %p61 = por %p59, %p60
      %s63 = sadd.s32 %s62, 1
      %p66 = scmp.eq.s32.totalorder %s14, 1
      %p67 = scmp.ne.s32.totalorder %s62, %s64
      %p68 = scmp.eq.s32.totalorder %s14, 0
      %p69 = por %p67, %p68
      %p70 = scmp.ne.s32.totalorder %s62, %s64
      %p71 = scmp.eq.s32.totalorder %s19, 1
      %p72 = por %p70, %p71
      %p73 = scmp.ne.s32.totalorder %s64, %s65
      %p74 = scmp.eq.s32.totalorder %s19, 0
      %p75 = por %p73, %p74
      %p76 = scmp.ne.s32.totalorder %s64, %s65
      %p77 = scmp.eq.s32.totalorder %s20, 1
      %p78 = por %p76, %p77
      %p80 = scmp.ne.s32.totalorder %s65, %s79
      %p81 = scmp.eq.s32.totalorder %s20, 0
      %p82 = por %p80, %p81
      %s84 = sadd.s32 %s83, 1
      %p87 = scmp.eq.s32.totalorder %s14, 1
      %p88 = scmp.ne.s32.totalorder %s83, %s85
      %p89 = scmp.eq.s32.totalorder %s14, 0
      %p90 = por %p88, %p89
      %p91 = scmp.ne.s32.totalorder %s83, %s85
      %p92 = scmp.eq.s32.totalorder %s19, 1
      %p93 = por %p91, %p92
      %p94 = scmp.ne.s32.totalorder %s85, %s86
      %p95 = scmp.eq.s32.totalorder %s19, 0
      %p96 = por %p94, %p95
      %p97 = scmp.ne.s32.totalorder %s85, %s86
      %p98 = scmp.eq.s32.totalorder %s20, 1
      %p99 = por %p97, %p98
      %p101 = scmp.ne.s32.totalorder %s86, %s100
      %p102 = scmp.eq.s32.totalorder %s20, 0
      %p103 = por %p101, %p102
      %s105 = sadd.s32 %s104, 1
      %p108 = scmp.eq.s32.totalorder %s14, 1
      %p109 = scmp.ne.s32.totalorder %s104, %s106
      %p110 = scmp.eq.s32.totalorder %s14, 0
      %p111 = por %p109, %p110
      %p112 = scmp.ne.s32.totalorder %s104, %s106
      %p113 = scmp.eq.s32.totalorder %s19, 1
      %p114 = por %p112, %p113
      %p115 = scmp.ne.s32.totalorder %s106, %s107
      %p116 = scmp.eq.s32.totalorder %s19, 0
      %p117 = por %p115, %p116
      %p118 = scmp.ne.s32.totalorder %s106, %s107
      %p119 = scmp.eq.s32.totalorder %s20, 1
      %p120 = por %p118, %p119
      %p122 = scmp.ne.s32.totalorder %s107, %s121
      %p123 = scmp.eq.s32.totalorder %s20, 0
      %p124 = por %p122, %p123
      %s126 = sadd.s32 %s125, 1
      %p129 = scmp.eq.s32.totalorder %s14, 1
      %p130 = scmp.ne.s32.totalorder %s125, %s127
      %p131 = scmp.eq.s32.totalorder %s14, 0
      %p132 = por %p130, %p131
      %p133 = scmp.ne.s32.totalorder %s125, %s127
      %p134 = scmp.eq.s32.totalorder %s19, 1
      %p135 = por %p133, %p134
      %p136 = scmp.ne.s32.totalorder %s127, %s128
      %p137 = scmp.eq.s32.totalorder %s19, 0
      %p138 = por %p136, %p137
      %p139 = scmp.ne.s32.totalorder %s127, %s128
      %p140 = scmp.eq.s32.totalorder %s20, 1
      %p141 = por %p139, %p140
      %p143 = scmp.ne.s32.totalorder %s128, %s142
      %p144 = scmp.eq.s32.totalorder %s20, 0
      %p145 = por %p143, %p144
      %s146 = ssub.s32 %s21, %s33
      %s147 = ssub.s32 %s22, %s29
      %s148 = sor.u32 %s146, %s147
      %p149 = scmp.eq.s32.totalorder %s148, 0
      %s151 = sadd.s32 %s150, 1
      %s152 = scalar_select %p149, %s150, %s151
      %p155 = pneg %p149
      %p156 = scmp.eq.s32.totalorder %s14, 1
      %p157 = por %p155, %p156
      %p158 = scmp.ne.s32.totalorder %s150, %s153
      %p159 = scmp.eq.s32.totalorder %s14, 0
      %p160 = por %p158, %p159
      %p161 = scmp.ne.s32.totalorder %s150, %s153
      %p162 = scmp.eq.s32.totalorder %s19, 1
      %p163 = por %p161, %p162
      %p164 = scmp.ne.s32.totalorder %s153, %s154
      %p165 = scmp.eq.s32.totalorder %s19, 0
      %p166 = por %p164, %p165
      %p167 = scmp.ne.s32.totalorder %s153, %s154
      %p168 = scmp.eq.s32.totalorder %s20, 1
      %p169 = por %p167, %p168
      %p171 = scmp.ne.s32.totalorder %s154, %s170
      %p172 = scmp.eq.s32.totalorder %s20, 0
      %p173 = por %p171, %p172
      %p174 = scmp.le.s32.totalorder 1, %s14
      %p175 = scmp.lt.s32.totalorder %s14, 3
      %p176 = pnand %p174, %p175
      %p177 = pneg %p176
      // Predicated region
      $region9: #{pointgencon_forward.7} parent=5 // pred_check
        _
      $region10: #{pointgencon_forward.7} parent=5 // pred_check_branch
        %179 = sbr.rel (%p176) target = $region12
      $region11: #{pointgencon_forward.7} parent=5 // pred_region
        %s180 = ssub.s32 %s14, 1
        // Predicated region
        $region13: #{pointgencon_forward.7} parent=11 // pred_check
          %p181 = pneg %p75
        $region14: #{pointgencon_forward.7} parent=11 // pred_check_branch
          %183 = sbr.rel (%p181) target = $region16
        $region15: #{pointgencon_forward.7} parent=11 // pred_region
          _
        $region16: #{pointgencon_forward.7} parent=11 // pred_fallthru
          _
        // Predicated region
        $region17: #{pointgencon_forward.7} parent=11 // pred_check
          %p184 = pneg %p96
        $region18: #{pointgencon_forward.7} parent=11 // pred_check_branch
          %186 = sbr.rel (%p184) target = $region20
        $region19: #{pointgencon_forward.7} parent=11 // pred_region
          _
        $region20: #{pointgencon_forward.7} parent=11 // pred_fallthru
          _
        // Predicated region
        $region21: #{pointgencon_forward.7} parent=11 // pred_check
          %p187 = pneg %p117
        $region22: #{pointgencon_forward.7} parent=11 // pred_check_branch
          %189 = sbr.rel (%p187) target = $region24
        $region23: #{pointgencon_forward.7} parent=11 // pred_region
          _
        $region24: #{pointgencon_forward.7} parent=11 // pred_fallthru
          _
        // Predicated region
        $region25: #{pointgencon_forward.7} parent=11 // pred_check
          %p190 = pneg %p138
        $region26: #{pointgencon_forward.7} parent=11 // pred_check_branch
          %192 = sbr.rel (%p190) target = $region28
        $region27: #{pointgencon_forward.7} parent=11 // pred_region
          _
        $region28: #{pointgencon_forward.7} parent=11 // pred_fallthru
          _
      $region12: #{pointgencon_forward.7} parent=5 // pred_fallthru
        _
      %p193 = scmp.lt.s32.totalorder %s14, 2
      // Predicated region
      $region29: #{pointgencon_forward.7} parent=5 // pred_check
        %p194 = pneg %p193
      $region30: #{pointgencon_forward.7} parent=5 // pred_check_branch
        %196 = sbr.rel (%p194) target = $region32
      $region31: #{pointgencon_forward.7} parent=5 // pred_region
        // Predicated region
        $region33: #{pointgencon_forward.7} parent=31 // pred_check
          %p197 = pneg %p48
        $region34: #{pointgencon_forward.7} parent=31 // pred_check_branch
          %199 = sbr.rel (%p197) target = $region36
        $region35: #{pointgencon_forward.7} parent=31 // pred_region
          %p200 = scmp.lt.s32.totalorder %s21, 1
          %s201 = scalar_select %p200, %s21, 1
          %p202 = scmp.lt.s32.totalorder %s22, 0
          %s203 = scalar_select %p202, %s22, 0
          %s204 = smul.addr %s201, 2
          %s205 = sadd.s32 %s203, %s204
          %s206 = smul.addr %s205, 4
          %s207 = scalar_lea.vmem %s0, %s206
        $region36: #{pointgencon_forward.7} parent=31 // pred_fallthru
          _
      $region32: #{pointgencon_forward.7} parent=5 // pred_fallthru
        _
      %p208 = scmp.le.s32.totalorder 1, %s14
      %p209 = scmp.lt.s32.totalorder %s14, 3
      %p210 = pnand %p208, %p209
      %p211 = pneg %p210
      // Predicated region
      $region37: #{pointgencon_forward.7} parent=5 // pred_check
        _
      $region38: #{pointgencon_forward.7} parent=5 // pred_check_branch
        %213 = sbr.rel (%p210) target = $region40
      $region39: #{pointgencon_forward.7} parent=5 // pred_region
        %s214 = ssub.s32 %s14, 1
        %p215 = scmp.lt.s32.totalorder %s23, 1
        %s216 = scalar_select %p215, %s23, 1
        %p217 = scmp.lt.s32.totalorder %s24, 0
        %s218 = scalar_select %p217, %s24, 0
        %s219 = smul.addr %s216, 2
        %s220 = sadd.s32 %s218, %s219
        %s221 = smul.addr %s220, 4
        %s222 = scalar_lea.vmem %s0, %s221
        %p223 = pneg %p54
        %p224 = pneg %p51
        %p225 = pneg %p75
        %p226 = pneg %p72
        %p227 = pneg %p96
        %p228 = pneg %p93
        %p229 = pneg %p117
        %p230 = pneg %p114
        %p231 = pneg %p138
        %p232 = pneg %p135
        %p233 = pneg %p166
        %p234 = pneg %p163
        %s235 = sand.u32 %s153, 1
        %s236 = scalar_lea.sflag [#allocation3], %s235
        %s237 = sand.u32 %s153, 1
        %s238 = smul.addr %s237, 2
        %s239 = scalar_lea.vmem [#allocation2], %s238
        %p240 = scmp.lt.s32.totalorder %s23, 1
        %s241 = scalar_select %p240, %s23, 1
        %p242 = scmp.lt.s32.totalorder %s24, 0
        %s243 = scalar_select %p242, %s24, 0
        %s244 = smul.addr %s241, 2
        %s245 = sadd.s32 %s243, %s244
        %s246 = smul.addr %s245, 4
        %s247 = scalar_lea.vmem %s0, %s246
        %v249 = vld [vmem:[%s247] sm:$0xf]
        %v250 = vld [vmem:[%s247 + $0x4] sm:$0xf]
        %v251 = vunpack.c.l.bf16 %v249
        %v252 = vunpack.c.l.bf16 %v250
        %v253 = vld [vmem:[%s1] sm:$0xff]
        %v254 = vld [vmem:[%s1 + $0x8] sm:$0xff]
        %256 = vset.pattern.permute.xlu0 0
        %257 = vperm.xlu0 %256, %v253
        %v258 = vpop.permute.xlu0 %257
        %261 = vset.pattern.permute.xlu0 0
        %262 = vperm.xlu0 %261, %v254
        %v263 = vpop.permute.xlu0 %262
        %v265 = vmul.f32 %v251, %v258
        %v266 = vmul.f32 %v252, %v263
        %v267 = vld [vmem:[%s2] sm:$0xff]
        %v268 = vld [vmem:[%s2 + $0x8] sm:$0xff]
        %270 = vset.pattern.permute.xlu0 0
        %271 = vperm.xlu0 %270, %v267
        %v272 = vpop.permute.xlu0 %271
        %275 = vset.pattern.permute.xlu0 0
        %276 = vperm.xlu0 %275, %v268
        %v277 = vpop.permute.xlu0 %276
        %v279 = vadd.f32 %v265, %v272
        %v280 = vadd.f32 %v266, %v277
        %v281 = vmax.f32 %v279, 0.0
        %v282 = vmax.f32 %v280, 0.0
        %v283 = vpack.c.bf16 %v282, %v281
        %v284 = vld [vmem:[%s3] sm:$0x1]
        %v285 = vld [vmem:[%s4] sm:$0x3]
        %287 = vset.pattern.permute.xlu0 0
        %288 = vperm.xlu0 %287, %v285
        %v289 = vpop.permute.xlu0 %288
        %vm291 = vcmask 130048
        %v293 = vsel %vm291, %v284, 0
        %295 = vmatprep.subr.bf16.mxu0 0
        %296 = vmatpush1.bf16.msra.mxu0 %v283
        %297 = vmatprep.subr.bf16.mxu0 0
        %298 = vmatpush1.bf16.msra.mxu0 0
        %299 = vmatprep.subr.bf16.mxu0 0
        %300 = vmatpush1.bf16.msra.mxu0 0
        %301 = vmatprep.subr.bf16.mxu0 0
        %302 = vmatpush1.bf16.msra.mxu0 0
        %303 = vmatprep.subr.bf16.mxu0 0
        %304 = vmatpush1.bf16.msra.mxu0 0
        %305 = vmatprep.subr.bf16.mxu0 0
        %306 = vmatpush1.bf16.msra.mxu0 0
        %307 = vmatprep.subr.bf16.mxu0 0
        %308 = vmatpush1.bf16.msra.mxu0 0
        %309 = vmatprep.subr.bf16.mxu0 0
        %310 = vmatpush1.bf16.msra.mxu0 0
        %311 = vmatprep.subr.bf16.mxu0 0
        %312 = vmatpush1.bf16.msra.mxu0 0
        %313 = vmatprep.subr.bf16.mxu0 0
        %314 = vmatpush1.bf16.msra.mxu0 0
        %315 = vmatprep.subr.bf16.mxu0 0
        %316 = vmatpush1.bf16.msra.mxu0 0
        %317 = vmatprep.subr.bf16.mxu0 0
        %318 = vmatpush1.bf16.msra.mxu0 0
        %319 = vmatprep.subr.bf16.mxu0 0
        %320 = vmatpush1.bf16.msra.mxu0 0
        %321 = vmatprep.subr.bf16.mxu0 0
        %322 = vmatpush1.bf16.msra.mxu0 0
        %323 = vmatprep.subr.bf16.mxu0 0
        %324 = vmatpush1.bf16.msra.mxu0 0
        %325 = vmatprep.subr.bf16.mxu0 0
        %326 = vmatpush1.bf16.msra.mxu0 0
        %327 = vmatprep.mubr.bf16.mxu0 0
        %328 = vmatmul.mubr.bf16.gmra.mrb[0].mxu0 %v293
        %v329 = vpop.f32.mrb[0].mxu0
        %v330 = vadd.f32 %v289, %v329
        %v331 = vpop.f32.mrb[0].mxu0
        %v332 = vpop.f32.mrb[0].mxu0
        %v333 = vpop.f32.mrb[0].mxu0
        %334 = vdwg.mxu0
        %v335 = vtanh.pop %v330
        %vm336 = vcmask 123904
        %337 = vst.msk [vmem:[%s239] sm:$0x3] %vm336, %v335
        %s338 = sand.u32 %s153, 1
        %s339 = scalar_lea.sflag [#allocation3], %s338
        %s340 = sand.u32 %s153, 1
        %s341 = smul.addr %s340, 2
        %s342 = scalar_lea.vmem [#allocation2], %s341
        // Predicated region
        $region41: #{pointgencon_forward.7} parent=39 // pred_check
          %p343 = pneg %p163
        $region42: #{pointgencon_forward.7} parent=39 // pred_check_branch
          %345 = sbr.rel (%p343) target = $region44
        $region43: #{pointgencon_forward.7} parent=39 // pred_region
          %s347 = ssub.s32 32, 32
          %348 = vsyncadd %s339, %s347
          %s349 = sadd.s32 %s24, %s23
          %s350 = smul.addr %s349, 32
          %s351 = scalar_lea.hbm %s5, %s350
          %s353 = sshll.u32 %s342, 4
          %s354 = int_to_ptr.vmem [resolvable:$true] %s353
          %356 = dma.vmem_to_hbm [thread:$0]  %s354, 32, %s351, %s339
        $region44: #{pointgencon_forward.7} parent=39 // pred_fallthru
          _
      $region40: #{pointgencon_forward.7} parent=5 // pred_fallthru
        _
      %p357 = scmp.le.s32.totalorder 2, %s14
      // Predicated region
      $region45: #{pointgencon_forward.7} parent=5 // pred_check
        %p358 = pneg %p357
      $region46: #{pointgencon_forward.7} parent=5 // pred_check_branch
        %360 = sbr.rel (%p358) target = $region48
      $region47: #{pointgencon_forward.7} parent=5 // pred_region
        %s361 = ssub.s32 %s14, 2
        // Predicated region
        $region49: #{pointgencon_forward.7} parent=47 // pred_check
          %p362 = pneg %p169
        $region50: #{pointgencon_forward.7} parent=47 // pred_check_branch
          %364 = sbr.rel (%p362) target = $region52
        $region51: #{pointgencon_forward.7} parent=47 // pred_region
          %s365 = sand.u32 %s154, 1
          %s366 = scalar_lea.sflag [#allocation3], %s365
          %s367 = sand.u32 %s154, 1
          %s368 = smul.addr %s367, 2
          %s369 = scalar_lea.vmem [#allocation2], %s368
          %370 = dma.done %s366, 32
        $region52: #{pointgencon_forward.7} parent=47 // pred_fallthru
          _
      $region48: #{pointgencon_forward.7} parent=5 // pred_fallthru
        _
    $region6: #{pointgencon_forward.7} parent=1 // loop_footer
      %s18 = sadd.s32 1, %s14
    $region7: #{pointgencon_forward.7} parent=1 // loop_footer_branch
      %13 = sbr.rel target = $region3
    $region8: #{pointgencon_forward.7} parent=1 // loop_exit
      _
    %371 = vsyncpa [#allocation3], 1
    %s372 = scalar_lea.sflag [#allocation3], 1
    %373 = vsyncpa %s372, 1

</llo_original>
